<compile_context>
chip_gen: v7x
topology: tpu7x:2x2x1
jax: 0.10.0
libtpu: 0.0.40
codegen_flags: <defaults>
</compile_context>

<pallas_src>
import functools
import math

import jax
import jax.numpy as jnp
from jax.experimental import pallas as pl
from jax.experimental.pallas import tpu as pltpu


# -----------------------------------------------------------------------------
# Kernel: online-softmax attention over grid (batch, head-block, kv-block).
# -----------------------------------------------------------------------------
def _attn_kernel(q_ref, k_ref, v_ref, m_ref, o_ref,
                 m_sc, l_sc, acc_sc, *, scale, compute_dtype):
    kv = pl.program_id(2)

    @pl.when(kv == 0)
    def _init():
        m_sc[...] = jnp.full_like(m_sc, -jnp.inf)
        l_sc[...] = jnp.zeros_like(l_sc)
        acc_sc[...] = jnp.zeros_like(acc_sc)

    # Fold 1/sqrt(D) into q (T*S*D multiplies, not T*S*S) and feed the MXU
    # bf16 inputs with f32 accumulation. Softmax math stays f32.
    q = (q_ref[0] * scale).astype(compute_dtype)   # (T, S, D)
    k = k_ref[0].astype(compute_dtype)             # (T, Tk, D)
    v = v_ref[0].astype(compute_dtype)             # (T, Tk, D)
    m = m_ref[0]                                    # (mT, S, Tk), mT in {1, T}

    # Batched Q K^T: contraction on the last dim of both operands (no k.T).
    s = jnp.einsum("tqd,tkd->tqk", q, k, preferred_element_type=jnp.float32)
    s = s + m.astype(jnp.float32)   # additive mask; broadcasts over heads if mT == 1

    # Online (flash-style) softmax statistics, all in f32.
    m_prev = m_sc[...]
    m_new = jnp.maximum(m_prev, jnp.max(s, axis=-1, keepdims=True))
    alpha = jnp.exp(m_prev - m_new)
    p = jnp.exp(s - m_new)
    l_sc[...] = alpha * l_sc[...] + jnp.sum(p, axis=-1, keepdims=True)
    acc_sc[...] = alpha * acc_sc[...] + jnp.einsum(
        "tqk,tkd->tqd", p.astype(compute_dtype), v,
        preferred_element_type=jnp.float32)
    m_sc[...] = m_new

    @pl.when(kv == pl.num_programs(2) - 1)
    def _finalize():
        inv = pl.reciprocal(l_sc[...], approx=True)   # EUP vrcp, free next to exp
        o_ref[0] = (acc_sc[...] * inv).astype(o_ref.dtype)


# -----------------------------------------------------------------------------
# VMEM accounting with (8, 128) padding and tile selection.
# -----------------------------------------------------------------------------
def _round_up(x, m):
    return ((x + m - 1) // m) * m


def _tile_vmem_bytes(T, mT, S, D, Tk, in_isz, mask_isz, out_isz):
    """Padded VMEM footprint (bytes) of one grid step (double-buffered DMAs)."""
    s8 = _round_up(S, 8)            # sublane padding
    dl = _round_up(D, 128)          # lane padding of the head dim
    tk8 = _round_up(Tk, 8)
    tkl = _round_up(Tk, 128)
    q = 2 * T * s8 * dl * in_isz
    kv = 2 * 2 * T * tk8 * dl * in_isz
    mk = 2 * mT * s8 * tkl * mask_isz
    out = 2 * T * s8 * dl * out_isz
    scratch = T * s8 * dl * 4 + 2 * T * s8 * 128 * 4   # f32 acc + (m, l) stats
    score = 2 * T * s8 * tkl * 4                       # s and p f32 slabs
    return q + kv + mk + out + scratch + score


def _pick_tiling(B, H, S, D, mH, in_isz, mask_isz, out_isz, budget):
    head_cands = [t for t in range(1, H + 1) if H % t == 0]
    if B == 1 and H > 1:
        # Keep >= 2 head blocks so both v7x TensorCores get parallel work.
        head_cands = [t for t in head_cands if t <= H // 2] or [1]

    # Preferred path: whole key/value length per step, largest head block.
    for t in sorted(head_cands, reverse=True):
        mT = t if mH == H else 1
        if _tile_vmem_bytes(t, mT, S, D, S, in_isz, mask_isz, out_isz) <= budget:
            return t, S

    # Flash / online-softmax fallback: one head per step, KV tiles that are
    # multiples of 128 lanes (required by the mask block's last dim).
    for tk in sorted((c for c in range(128, S, 128) if S % c == 0), reverse=True):
        if _tile_vmem_bytes(1, 1, S, D, tk, in_isz, mask_isz, out_isz) <= budget:
            return 1, tk

    # TODO(synk): also tile the query dimension for extremely long sequences.
    raise NotImplementedError(
        f"attention tile does not fit in the VMEM budget ({budget} bytes) for "
        f"S={S}, D={D}; query-dim tiling is not implemented")


# -----------------------------------------------------------------------------
# Wrapper.
# -----------------------------------------------------------------------------
def sdpa_pallas(query, key, value, mask1, *, vmem_budget_bytes=None):
    """query/key/value: [B, H, S, D]; mask1: additive, broadcastable to [B, H, S, S]."""
    B, H, S, D = query.shape
    assert key.shape == (B, H, S, D) and value.shape == (B, H, S, D)

    # Normalize the mask to 4-D with trailing (S, S); do NOT broadcast the
    # batch/head dims -- the BlockSpec index_map reuses the same block instead.
    m4 = mask1
    while m4.ndim < 4:
        m4 = m4[None]
    assert m4.ndim == 4
    if m4.shape[-2:] != (S, S):
        m4 = jnp.broadcast_to(m4, m4.shape[:-2] + (S, S))
    mB, mH = m4.shape[0], m4.shape[1]
    assert mB in (1, B) and mH in (1, H), "mask must be broadcastable to [B,H,S,S]"

    in_isz = jnp.dtype(query.dtype).itemsize
    mask_isz = jnp.dtype(m4.dtype).itemsize
    out_dtype = query.dtype
    out_isz = jnp.dtype(out_dtype).itemsize

    # Physical VMEM (v5e/v6e: 128 MiB, v7x: 64 MiB); conservative fallback.
    try:
        vmem_cap = int(pltpu.get_tpu_info().vmem_capacity_bytes)
        if vmem_cap <= 0:
            raise ValueError("bad vmem capacity")
    except Exception:
        vmem_cap = 64 * 1024 * 1024
    budget = vmem_budget_bytes if vmem_budget_bytes is not None else (3 * vmem_cap) // 4

    T, Tk = _pick_tiling(B, H, S, D, mH, in_isz, mask_isz, out_isz, budget)
    Hb = H // T
    Kb = S // Tk
    mT = T if mH == H else 1

    est = _tile_vmem_bytes(T, mT, S, D, Tk, in_isz, mask_isz, out_isz)
    # Never exceed physical VMEM with the scoped-VMEM hint.
    vmem_limit = int(min(vmem_cap, max(32 * 1024 * 1024, (5 * est) // 4)))

    compute_dtype = jnp.bfloat16 if query.dtype == jnp.float32 else query.dtype
    scale = 1.0 / math.sqrt(D)

    q_spec = pl.BlockSpec((1, T, S, D), lambda b, h, kk: (b, h, 0, 0))
    kv_spec = pl.BlockSpec((1, T, Tk, D), lambda b, h, kk: (b, h, kk, 0))
    msk_spec = pl.BlockSpec(
        (1, mT, S, Tk),
        lambda b, h, kk: (b if mB == B else 0, h if mH == H else 0, 0, kk))
    out_spec = pl.BlockSpec((1, T, S, D), lambda b, h, kk: (b, h, 0, 0))

    kernel = functools.partial(_attn_kernel, scale=scale,
                               compute_dtype=compute_dtype)

    return pl.pallas_call(
        kernel,
        out_shape=jax.ShapeDtypeStruct((B, H, S, D), out_dtype),
        grid_spec=pltpu.PrefetchScalarGridSpec(
            num_scalar_prefetch=0,
            grid=(B, Hb, Kb),                 # reduction (kv) axis last
            in_specs=[q_spec, kv_spec, kv_spec, msk_spec],
            out_specs=out_spec,
            scratch_shapes=[
                pltpu.VMEM((T, S, 1), jnp.float32),   # running max
                pltpu.VMEM((T, S, 1), jnp.float32),   # running denominator
                pltpu.VMEM((T, S, D), jnp.float32),   # f32 output accumulator
            ]),
        compiler_params=pltpu.CompilerParams(
            dimension_semantics=("parallel", "parallel", "arbitrary"),
            vmem_limit_bytes=vmem_limit),
    )(query, key, value, m4)


def sdpa_reference(query, key, value, mask1):
    d = query.shape[-1]
    qk = jnp.einsum("bhqd,bhkd->bhqk", query, key,
                    precision=jax.lax.Precision.HIGHEST) / math.sqrt(d)
    qk = qk + mask1
    w = jax.nn.softmax(qk, axis=-1)
    return jnp.einsum("bhqk,bhkd->bhqd", w, value,
                      precision=jax.lax.Precision.HIGHEST)


if __name__ == "__main__":
    B, H, S, D = 2, 4, 16, 32

    root = jax.random.PRNGKey(0)
    kq, kk, kv, km = jax.random.split(root, 4)
    query = jax.random.normal(kq, (B, H, S, D), dtype=jnp.float32)
    key_t = jax.random.normal(kk, (B, H, S, D), dtype=jnp.float32)
    value = jax.random.normal(kv, (B, H, S, D), dtype=jnp.float32)
    mask1 = jax.random.normal(km, (B, H, S, S), dtype=jnp.float32)

    # bf16 MXU inputs + approx reciprocal => bf16-level tolerance vs the
    # HIGHEST-precision f32 reference.
    TOL = dict(atol=3e-2, rtol=3e-2)

    out = jax.block_until_ready(sdpa_pallas(query, key_t, value, mask1))
    ref = sdpa_reference(query, key_t, value, mask1)
    assert out.shape == ref.shape
    assert jnp.allclose(out, ref, **TOL), "mismatch vs reference (full mask)"

    # Broadcastable mask [B, 1, S, S]: the same SxS block is reused across
    # heads via the index_map (no wrapper-side broadcast / extra DMA).
    mask_b = mask1[:, :1]
    out_b = jax.block_until_ready(sdpa_pallas(query, key_t, value, mask_b))
    ref_b = sdpa_reference(query, key_t, value, mask_b)
    assert jnp.allclose(out_b, ref_b, **TOL), "mismatch vs reference (bcast mask)"

    # Exercise the KV-tiled (online-softmax) fallback by shrinking the VMEM
    # budget so a single KV tile no longer fits (picks Tk=128, Kb=2).
    B2, H2, S2, D2 = 1, 2, 256, 32
    kq2, kk2, kv2, km2 = jax.random.split(jax.random.PRNGKey(1), 4)
    q2 = jax.random.normal(kq2, (B2, H2, S2, D2), dtype=jnp.float32)
    k2 = jax.random.normal(kk2, (B2, H2, S2, D2), dtype=jnp.float32)
    v2 = jax.random.normal(kv2, (B2, H2, S2, D2), dtype=jnp.float32)
    m2 = jax.random.normal(km2, (B2, 1, S2, S2), dtype=jnp.float32)
    out2 = jax.block_until_ready(
        sdpa_pallas(q2, k2, v2, m2, vmem_budget_bytes=2 * 1024 * 1024))
    ref2 = sdpa_reference(q2, k2, v2, m2)
    assert jnp.allclose(out2, ref2, **TOL), "mismatch vs reference (kv-tiled)"

    print("KERNEL_OK")
</pallas_src>

<mosaic_0001>
module attributes {stable_mosaic.version = 11 : i64} {
  func.func @_attn_kernel(%arg0: i32, %arg1: i32, %arg2: i32, %arg3: memref<1x4x16x32xf32, #tpu.memory_space<vmem>>, %arg4: memref<1x4x16x32xf32, #tpu.memory_space<vmem>>, %arg5: memref<1x4x16x32xf32, #tpu.memory_space<vmem>>, %arg6: memref<1x4x16x16xf32, #tpu.memory_space<vmem>>, %arg7: memref<1x4x16x32xf32, #tpu.memory_space<vmem>>, %arg8: memref<4x16x1xf32, #tpu.memory_space<vmem>>, %arg9: memref<4x16x1xf32, #tpu.memory_space<vmem>>, %arg10: memref<4x16x32xf32, #tpu.memory_space<vmem>>) attributes {dimension_semantics = [#tpu.dimension_semantics<parallel>, #tpu.dimension_semantics<parallel>, #tpu.dimension_semantics<arbitrary>], iteration_bounds = array<i64: 2, 1, 1>, scalar_prefetch = 0 : i64, scratch_operands = 3 : i64, tpu.core_type = #tpu.core_type<tc>, window_params = [{transform_indices = @transform_0, window_bounds = array<i64: 1, 4, 16, 32>}, {transform_indices = @transform_1, window_bounds = array<i64: 1, 4, 16, 32>}, {transform_indices = @transform_2, window_bounds = array<i64: 1, 4, 16, 32>}, {transform_indices = @transform_3, window_bounds = array<i64: 1, 4, 16, 16>}, {transform_indices = @transform_4, window_bounds = array<i64: 1, 4, 16, 32>}]} {
    %c0_i32 = arith.constant 0 : i32
    %0 = arith.cmpi eq, %arg2, %c0_i32 : i32
    %1 = arith.extui %0 : i1 to i32
    %c0_i32_0 = arith.constant 0 : i32
    %2 = arith.cmpi ne, %1, %c0_i32_0 : i32
    scf.if %2 {
      %cst_40 = arith.constant 0xFF800000 : f32
      %44 = vector.broadcast %cst_40 : f32 to vector<4x16x1xf32>
      %c0_41 = arith.constant 0 : index
      %c0_42 = arith.constant 0 : index
      %c0_43 = arith.constant 0 : index
      %45 = vector.load %arg8[%c0_41, %c0_42, %c0_43] : memref<4x16x1xf32, #tpu.memory_space<vmem>>, vector<4x16x1xf32>
      tpu.vector_store %arg8[%c0_41, %c0_42, %c0_43], %44 {strides = array<i32>} : memref<4x16x1xf32, #tpu.memory_space<vmem>>, vector<4x16x1xf32>,
      %cst_44 = arith.constant 0.000000e+00 : f32
      %46 = vector.broadcast %cst_44 : f32 to vector<4x16x1xf32>
      %c0_45 = arith.constant 0 : index
      %c0_46 = arith.constant 0 : index
      %c0_47 = arith.constant 0 : index
      %47 = vector.load %arg9[%c0_45, %c0_46, %c0_47] : memref<4x16x1xf32, #tpu.memory_space<vmem>>, vector<4x16x1xf32>
      tpu.vector_store %arg9[%c0_45, %c0_46, %c0_47], %46 {strides = array<i32>} : memref<4x16x1xf32, #tpu.memory_space<vmem>>, vector<4x16x1xf32>,
      %cst_48 = arith.constant 0.000000e+00 : f32
      %48 = vector.broadcast %cst_48 : f32 to vector<4x16x32xf32>
      %c0_49 = arith.constant 0 : index
      %c0_50 = arith.constant 0 : index
      %c0_51 = arith.constant 0 : index
      %49 = vector.load %arg10[%c0_49, %c0_50, %c0_51] : memref<4x16x32xf32, #tpu.memory_space<vmem>>, vector<4x16x32xf32>
      tpu.vector_store %arg10[%c0_49, %c0_50, %c0_51], %48 {strides = array<i32>} : memref<4x16x32xf32, #tpu.memory_space<vmem>>, vector<4x16x32xf32>,
    } else {
    }
    %c0 = arith.constant 0 : index
    %c0_1 = arith.constant 0 : index
    %c0_2 = arith.constant 0 : index
    %c0_3 = arith.constant 0 : index
    %3 = vector.load %arg3[%c0, %c0_1, %c0_2, %c0_3] : memref<1x4x16x32xf32, #tpu.memory_space<vmem>>, vector<1x4x16x32xf32>
    %4 = vector.shape_cast %3 : vector<1x4x16x32xf32> to vector<4x16x32xf32>
    %cst = arith.constant 0.176776692 : f32
    %5 = vector.broadcast %cst : f32 to vector<4x16x32xf32>
    %6 = arith.mulf %4, %5 : vector<4x16x32xf32>
    %7 = arith.truncf %6 : vector<4x16x32xf32> to vector<4x16x32xbf16>
    %c0_4 = arith.constant 0 : index
    %c0_5 = arith.constant 0 : index
    %c0_6 = arith.constant 0 : index
    %c0_7 = arith.constant 0 : index
    %8 = vector.load %arg4[%c0_4, %c0_5, %c0_6, %c0_7] : memref<1x4x16x32xf32, #tpu.memory_space<vmem>>, vector<1x4x16x32xf32>
    %9 = vector.shape_cast %8 : vector<1x4x16x32xf32> to vector<4x16x32xf32>
    %10 = arith.truncf %9 : vector<4x16x32xf32> to vector<4x16x32xbf16>
    %c0_8 = arith.constant 0 : index
    %c0_9 = arith.constant 0 : index
    %c0_10 = arith.constant 0 : index
    %c0_11 = arith.constant 0 : index
    %11 = vector.load %arg5[%c0_8, %c0_9, %c0_10, %c0_11] : memref<1x4x16x32xf32, #tpu.memory_space<vmem>>, vector<1x4x16x32xf32>
    %12 = vector.shape_cast %11 : vector<1x4x16x32xf32> to vector<4x16x32xf32>
    %13 = arith.truncf %12 : vector<4x16x32xf32> to vector<4x16x32xbf16>
    %c0_12 = arith.constant 0 : index
    %c0_13 = arith.constant 0 : index
    %c0_14 = arith.constant 0 : index
    %c0_15 = arith.constant 0 : index
    %14 = vector.load %arg6[%c0_12, %c0_13, %c0_14, %c0_15] : memref<1x4x16x16xf32, #tpu.memory_space<vmem>>, vector<1x4x16x16xf32>
    %15 = vector.shape_cast %14 : vector<1x4x16x16xf32> to vector<4x16x16xf32>
    "tpu.trace_start"() <{level = 10 : i32, message = "tqd,tkd->tqk"}> : () -> ()
    %cst_16 = arith.constant dense<0.000000e+00> : vector<4x16x16xf32>
    %16 = tpu.matmul %7, %10, %cst_16 {dimension_numbers = #tpu.dot_dimension_numbers<[2], [2], [1], [1], [0, 0, 0, 1, 1, 1], [0], [0]>} : vector<4x16x32xbf16>, vector<4x16x32xbf16>, vector<4x16x16xf32> -> vector<4x16x16xf32>
    "tpu.trace_stop"() : () -> ()
    %17 = arith.addf %16, %15 : vector<4x16x16xf32>
    %c0_17 = arith.constant 0 : index
    %c0_18 = arith.constant 0 : index
    %c0_19 = arith.constant 0 : index
    %18 = vector.load %arg8[%c0_17, %c0_18, %c0_19] : memref<4x16x1xf32, #tpu.memory_space<vmem>>, vector<4x16x1xf32>
    %cst_20 = arith.constant dense<0xFF800000> : vector<4x16xf32>
    %19 = vector.multi_reduction <maximumf>, %17, %cst_20 [2] : vector<4x16x16xf32> to vector<4x16xf32>
    %20 = vector.shape_cast %19 : vector<4x16xf32> to vector<4x16x1xf32>
    %21 = arith.maximumf %18, %20 : vector<4x16x1xf32>
    %22 = arith.subf %18, %21 : vector<4x16x1xf32>
    %23 = math.exp %22 : vector<4x16x1xf32>
    %24 = vector.broadcast %21 : vector<4x16x1xf32> to vector<4x16x16xf32>
    %25 = arith.subf %17, %24 : vector<4x16x16xf32>
    %26 = math.exp %25 : vector<4x16x16xf32>
    %c0_21 = arith.constant 0 : index
    %c0_22 = arith.constant 0 : index
    %c0_23 = arith.constant 0 : index
    %27 = vector.load %arg9[%c0_21, %c0_22, %c0_23] : memref<4x16x1xf32, #tpu.memory_space<vmem>>, vector<4x16x1xf32>
    %28 = arith.mulf %23, %27 : vector<4x16x1xf32>
    %cst_24 = arith.constant dense<0.000000e+00> : vector<4x16xf32>
    %29 = vector.multi_reduction <add>, %26, %cst_24 [2] : vector<4x16x16xf32> to vector<4x16xf32>
    %30 = vector.shape_cast %29 : vector<4x16xf32> to vector<4x16x1xf32>
    %31 = arith.addf %28, %30 : vector<4x16x1xf32>
    %c0_25 = arith.constant 0 : index
    %c0_26 = arith.constant 0 : index
    %c0_27 = arith.constant 0 : index
    %32 = vector.load %arg9[%c0_25, %c0_26, %c0_27] : memref<4x16x1xf32, #tpu.memory_space<vmem>>, vector<4x16x1xf32>
    tpu.vector_store %arg9[%c0_25, %c0_26, %c0_27], %31 {strides = array<i32>} : memref<4x16x1xf32, #tpu.memory_space<vmem>>, vector<4x16x1xf32>,
    %c0_28 = arith.constant 0 : index
    %c0_29 = arith.constant 0 : index
    %c0_30 = arith.constant 0 : index
    %33 = vector.load %arg10[%c0_28, %c0_29, %c0_30] : memref<4x16x32xf32, #tpu.memory_space<vmem>>, vector<4x16x32xf32>
    %34 = vector.broadcast %23 : vector<4x16x1xf32> to vector<4x16x32xf32>
    %35 = arith.mulf %34, %33 : vector<4x16x32xf32>
    %36 = arith.truncf %26 : vector<4x16x16xf32> to vector<4x16x16xbf16>
    "tpu.trace_start"() <{level = 10 : i32, message = "tqk,tkd->tqd"}> : () -> ()
    %cst_31 = arith.constant dense<0.000000e+00> : vector<4x16x32xf32>
    %37 = tpu.matmul %36, %13, %cst_31 {dimension_numbers = #tpu.dot_dimension_numbers<[2], [1], [1], [2], [0, 0, 0, 1, 1, 2], [0], [0]>} : vector<4x16x16xbf16>, vector<4x16x32xbf16>, vector<4x16x32xf32> -> vector<4x16x32xf32>
    "tpu.trace_stop"() : () -> ()
    %38 = arith.addf %35, %37 : vector<4x16x32xf32>
    %c0_32 = arith.constant 0 : index
    %c0_33 = arith.constant 0 : index
    %c0_34 = arith.constant 0 : index
    %39 = vector.load %arg10[%c0_32, %c0_33, %c0_34] : memref<4x16x32xf32, #tpu.memory_space<vmem>>, vector<4x16x32xf32>
    tpu.vector_store %arg10[%c0_32, %c0_33, %c0_34], %38 {strides = array<i32>} : memref<4x16x32xf32, #tpu.memory_space<vmem>>, vector<4x16x32xf32>,
    %c0_35 = arith.constant 0 : index
    %c0_36 = arith.constant 0 : index
    %c0_37 = arith.constant 0 : index
    %40 = vector.load %arg8[%c0_35, %c0_36, %c0_37] : memref<4x16x1xf32, #tpu.memory_space<vmem>>, vector<4x16x1xf32>
    tpu.vector_store %arg8[%c0_35, %c0_36, %c0_37], %21 {strides = array<i32>} : memref<4x16x1xf32, #tpu.memory_space<vmem>>, vector<4x16x1xf32>,
    %c0_i32_38 = arith.constant 0 : i32
    %41 = arith.cmpi eq, %arg2, %c0_i32_38 : i32
    %42 = arith.extui %41 : i1 to i32
    %c0_i32_39 = arith.constant 0 : i32
    %43 = arith.cmpi ne, %42, %c0_i32_39 : i32
    scf.if %43 {
      %c0_40 = arith.constant 0 : index
      %c0_41 = arith.constant 0 : index
      %c0_42 = arith.constant 0 : index
      %44 = vector.load %arg9[%c0_40, %c0_41, %c0_42] : memref<4x16x1xf32, #tpu.memory_space<vmem>>, vector<4x16x1xf32>
      %45 = tpu.reciprocal %44 {approx = true} : vector<4x16x1xf32> -> vector<4x16x1xf32>
      %c0_43 = arith.constant 0 : index
      %c0_44 = arith.constant 0 : index
      %c0_45 = arith.constant 0 : index
      %46 = vector.load %arg10[%c0_43, %c0_44, %c0_45] : memref<4x16x32xf32, #tpu.memory_space<vmem>>, vector<4x16x32xf32>
      %47 = vector.broadcast %45 : vector<4x16x1xf32> to vector<4x16x32xf32>
      %48 = arith.mulf %46, %47 : vector<4x16x32xf32>
      %c0_46 = arith.constant 0 : index
      %c0_47 = arith.constant 0 : index
      %c0_48 = arith.constant 0 : index
      %c0_49 = arith.constant 0 : index
      %49 = vector.load %arg7[%c0_46, %c0_47, %c0_48, %c0_49] : memref<1x4x16x32xf32, #tpu.memory_space<vmem>>, vector<1x4x16x32xf32>
      %50 = vector.shape_cast %49 : vector<1x4x16x32xf32> to vector<4x16x32xf32>
      %51 = vector.shape_cast %48 : vector<4x16x32xf32> to vector<1x4x16x32xf32>
      tpu.vector_store %arg7[%c0_46, %c0_47, %c0_48, %c0_49], %51 {strides = array<i32>} : memref<1x4x16x32xf32, #tpu.memory_space<vmem>>, vector<1x4x16x32xf32>,
    } else {
    }
    return
  }
  func.func @transform_0(%arg0: i32, %arg1: i32, %arg2: i32) -> (i32, i32, i32, i32) {
    %c0_i32 = arith.constant 0 : i32
    %c0_i32_0 = arith.constant 0 : i32
    %c0_i32_1 = arith.constant 0 : i32
    return %arg0, %arg1, %c0_i32, %c0_i32_0 : i32, i32, i32, i32
  }
  func.func @transform_1(%arg0: i32, %arg1: i32, %arg2: i32) -> (i32, i32, i32, i32) {
    %c0_i32 = arith.constant 0 : i32
    %c0_i32_0 = arith.constant 0 : i32
    return %arg0, %arg1, %arg2, %c0_i32 : i32, i32, i32, i32
  }
  func.func @transform_2(%arg0: i32, %arg1: i32, %arg2: i32) -> (i32, i32, i32, i32) {
    %c0_i32 = arith.constant 0 : i32
    %c0_i32_0 = arith.constant 0 : i32
    return %arg0, %arg1, %arg2, %c0_i32 : i32, i32, i32, i32
  }
  func.func @transform_3(%arg0: i32, %arg1: i32, %arg2: i32) -> (i32, i32, i32, i32) {
    %c0_i32 = arith.constant 0 : i32
    %c0_i32_0 = arith.constant 0 : i32
    return %arg0, %arg1, %c0_i32, %arg2 : i32, i32, i32, i32
  }
  func.func @transform_4(%arg0: i32, %arg1: i32, %arg2: i32) -> (i32, i32, i32, i32) {
    %c0_i32 = arith.constant 0 : i32
    %c0_i32_0 = arith.constant 0 : i32
    %c0_i32_1 = arith.constant 0 : i32
    return %arg0, %arg1, %c0_i32, %c0_i32_0 : i32, i32, i32, i32
  }
}

</mosaic_0001>

<llo_original>
// kernel: tpu_custom_call.1
$region0: #{tpu_custom_call.1}
  #allocation0 [shape = 'u32[]', space=smem, size = 0x4, offset = 0x4, fixed_abs, tag = 'smem constant byte address 0x4 - core index']
  #allocation1 [shape = 'u32[144,128]{1,0:T(1,128)}', space=vmem, size = 0x12000, scoped, tag = 'internal scratch']
  #allocation2 [shape = 'f32[4,16,1]{2,1,0:T(8,128)}', space=vmem, size = 0x8000, scoped, tag = 'scratch operand']
  #allocation3 [shape = 'f32[4,16,1]{2,1,0:T(8,128)}', space=vmem, size = 0x8000, scoped, tag = 'scratch operand']
  #allocation4 [shape = 'f32[4,16,32]{2,1,0:T(8,128)}', space=vmem, size = 0x8000, scoped, tag = 'scratch operand']
  %s0 = inlined_call_operand.hbm [shape: f32[2,4,16,32], index: 0, kind: input, shape index: {}]
  %s1 = inlined_call_operand.hbm [shape: f32[2,4,16,32], index: 1, kind: input, shape index: {}]
  %s2 = inlined_call_operand.hbm [shape: f32[2,4,16,32], index: 2, kind: input, shape index: {}]
  %s3 = inlined_call_operand.hbm [shape: f32[2,4,16,16], index: 3, kind: input, shape index: {}]
  %s4 = inlined_call_operand.hbm [shape: f32[2,4,16,32], index: 4, kind: output, shape index: {}]
  %s5 = sld [smem:[#allocation0]]
  $region73: #{tpu_custom_call.1} parent=0
    _
  %s7 = ssub.s32 1, %s5
  %s8 = scalar_select 0, %s7, %s5
  $region1: #{tpu_custom_call.1} parent=0
    #allocation5 [shape = 'u8[65536]{0}', space=vmem, size = 0x10000, scoped, tag = 'input window, operand 0']
    #allocation6 [shape = 's32[2]{0}', space=sflag, size = 0x8, scoped, tag = 'scoped memory for tpu_custom_call.1']
    #allocation7 [shape = 's32[2]{0}', space=sflag, size = 0x8, scoped, tag = 'scoped memory for tpu_custom_call.1']
    #allocation8 [shape = 'u8[65536]{0}', space=vmem, size = 0x10000, scoped, tag = 'input window, operand 1']
    #allocation9 [shape = 's32[2]{0}', space=sflag, size = 0x8, scoped, tag = 'scoped memory for tpu_custom_call.1']
    #allocation10 [shape = 'u8[65536]{0}', space=vmem, size = 0x10000, scoped, tag = 'input window, operand 2']
    #allocation11 [shape = 'u8[65536]{0}', space=vmem, size = 0x10000, scoped, tag = 'input window, operand 3']
    #allocation12 [shape = 's32[2]{0}', space=sflag, size = 0x8, scoped, tag = 'scoped memory for tpu_custom_call.1']
    #allocation13 [shape = 'u8[65536]{0}', space=vmem, size = 0x10000, scoped, tag = 'output window, operand 0']
    %9 = vsyncpa [#allocation6], 0
    %s10 = scalar_lea.sflag [#allocation6], 1
    %11 = vsyncpa %s10, 0
    %12 = vsyncpa [#allocation9], 0
    %s13 = scalar_lea.sflag [#allocation9], 1
    %14 = vsyncpa %s13, 0
    %15 = vsyncpa [#allocation12], 0
    %s16 = scalar_lea.sflag [#allocation12], 1
    %17 = vsyncpa %s16, 0
    %18 = vsyncpa [#allocation7], 0
    %s19 = scalar_lea.sflag [#allocation7], 1
    %20 = vsyncpa %s19, 0
    loop: start=0, step=1, limit=4
    $region2: #{tpu_custom_call.1} parent=1 // loop_pre_header
      _
    $region3: #{tpu_custom_call.1} parent=1 // loop_header
      %s22 = sphi 0, %s26
      %p23 = scmp.ge.s32.totalorder %s22, 4
      %s29 = sphi 0, %s48
      %s30 = sphi 0, %s44
      %s31 = sphi 0, %s40
      %s32 = sphi 0, %s29
      %s33 = sphi 0, %s30
      %s34 = sphi 0, %s31
      %s35 = sphi 0, %s32
      %s36 = sphi 0, %s33
      %s37 = sphi 0, %s34
      %s53 = sphi 0, %s55
      %s56 = sphi 0, %s53
      %s57 = sphi 0, %s56
      %s73 = sphi 0, %s57
      %s83 = sphi 0, %s85
      %s86 = sphi 0, %s83
      %s87 = sphi 0, %s86
      %s103 = sphi 0, %s87
      %s113 = sphi 0, %s115
      %s116 = sphi 0, %s113
      %s117 = sphi 0, %s116
      %s133 = sphi 0, %s117
      %s143 = sphi 0, %s145
      %s146 = sphi 0, %s143
      %s147 = sphi 0, %s146
      %s163 = sphi 0, %s147
      %s171 = sphi 0, %s173
      %s174 = sphi 0, %s171
      %s175 = sphi 0, %s174
      %s191 = sphi 0, %s175
    $region4: #{tpu_custom_call.1} parent=1 // loop_header_branch
      %25 = sbr.rel (%p23) target = $region8
    $region5: #{tpu_custom_call.1} parent=1 // loop_body
      %s27 = ssub.s32 %s22, 1
      %s28 = ssub.s32 %s22, 2
      %s38 = sadd.s32 1, %s31
      %p39 = scmp.ge.s32.totalorder %s38, 1
      %s40 = scalar_select %p39, 0, %s38
      %s41 = sadd.s32 1, %s30
      %s42 = scalar_select %p39, %s41, %s30
      %p43 = scmp.ge.s32.totalorder %s42, 1
      %s44 = scalar_select %p43, 0, %s42
      %s45 = sadd.s32 1, %s29
      %s46 = scalar_select %p43, %s45, %s29
      %p47 = scmp.ge.s32.totalorder %s46, 2
      %s48 = scalar_select %p47, 0, %s46
      %s49 = ssub.s32 %s29, %s48
      %s50 = ssub.s32 %s30, %s44
      %s51 = sor.u32 %s49, %s50
      %p52 = scmp.eq.s32.totalorder %s51, 0
      %s54 = sadd.s32 %s53, 1
      %s55 = scalar_select %p52, %s53, %s54
      %p58 = pneg %p52
      %p59 = scmp.eq.s32.totalorder %s22, 1
      %p60 = por %p58, %p59
      %p61 = scmp.ne.s32.totalorder %s53, %s56
      %p62 = scmp.eq.s32.totalorder %s22, 0
      %p63 = por %p61, %p62
      %p64 = scmp.ne.s32.totalorder %s53, %s56
      %p65 = scmp.eq.s32.totalorder %s27, 1
      %p66 = por %p64, %p65
      %p67 = scmp.ne.s32.totalorder %s56, %s57
      %p68 = scmp.eq.s32.totalorder %s27, 0
      %p69 = por %p67, %p68
      %p70 = scmp.ne.s32.totalorder %s56, %s57
      %p71 = scmp.eq.s32.totalorder %s28, 1
      %p72 = por %p70, %p71
      %p74 = scmp.ne.s32.totalorder %s57, %s73
      %p75 = scmp.eq.s32.totalorder %s28, 0
      %p76 = por %p74, %p75
      %s77 = ssub.s32 %s29, %s48
      %s78 = ssub.s32 %s30, %s44
      %s79 = sor.u32 %s77, %s78
      %s80 = ssub.s32 %s31, %s40
      %s81 = sor.u32 %s79, %s80
      %p82 = scmp.eq.s32.totalorder %s81, 0
      %s84 = sadd.s32 %s83, 1
      %s85 = scalar_select %p82, %s83, %s84
      %p88 = pneg %p82
      %p89 = scmp.eq.s32.totalorder %s22, 1
      %p90 = por %p88, %p89
      %p91 = scmp.ne.s32.totalorder %s83, %s86
      %p92 = scmp.eq.s32.totalorder %s22, 0
      %p93 = por %p91, %p92
      %p94 = scmp.ne.s32.totalorder %s83, %s86
      %p95 = scmp.eq.s32.totalorder %s27, 1
      %p96 = por %p94, %p95
      %p97 = scmp.ne.s32.totalorder %s86, %s87
      %p98 = scmp.eq.s32.totalorder %s27, 0
      %p99 = por %p97, %p98
      %p100 = scmp.ne.s32.totalorder %s86, %s87
      %p101 = scmp.eq.s32.totalorder %s28, 1
      %p102 = por %p100, %p101
      %p104 = scmp.ne.s32.totalorder %s87, %s103
      %p105 = scmp.eq.s32.totalorder %s28, 0
      %p106 = por %p104, %p105
      %s107 = ssub.s32 %s29, %s48
      %s108 = ssub.s32 %s30, %s44
      %s109 = sor.u32 %s107, %s108
      %s110 = ssub.s32 %s31, %s40
      %s111 = sor.u32 %s109, %s110
      %p112 = scmp.eq.s32.totalorder %s111, 0
      %s114 = sadd.s32 %s113, 1
      %s115 = scalar_select %p112, %s113, %s114
      %p118 = pneg %p112
      %p119 = scmp.eq.s32.totalorder %s22, 1
      %p120 = por %p118, %p119
      %p121 = scmp.ne.s32.totalorder %s113, %s116
      %p122 = scmp.eq.s32.totalorder %s22, 0
      %p123 = por %p121, %p122
      %p124 = scmp.ne.s32.totalorder %s113, %s116
      %p125 = scmp.eq.s32.totalorder %s27, 1
      %p126 = por %p124, %p125
      %p127 = scmp.ne.s32.totalorder %s116, %s117
      %p128 = scmp.eq.s32.totalorder %s27, 0
      %p129 = por %p127, %p128
      %p130 = scmp.ne.s32.totalorder %s116, %s117
      %p131 = scmp.eq.s32.totalorder %s28, 1
      %p132 = por %p130, %p131
      %p134 = scmp.ne.s32.totalorder %s117, %s133
      %p135 = scmp.eq.s32.totalorder %s28, 0
      %p136 = por %p134, %p135
      %s137 = ssub.s32 %s29, %s48
      %s138 = ssub.s32 %s30, %s44
      %s139 = sor.u32 %s137, %s138
      %s140 = ssub.s32 %s31, %s40
      %s141 = sor.u32 %s139, %s140
      %p142 = scmp.eq.s32.totalorder %s141, 0
      %s144 = sadd.s32 %s143, 1
      %s145 = scalar_select %p142, %s143, %s144
      %p148 = pneg %p142
      %p149 = scmp.eq.s32.totalorder %s22, 1
      %p150 = por %p148, %p149
      %p151 = scmp.ne.s32.totalorder %s143, %s146
      %p152 = scmp.eq.s32.totalorder %s22, 0
      %p153 = por %p151, %p152
      %p154 = scmp.ne.s32.totalorder %s143, %s146
      %p155 = scmp.eq.s32.totalorder %s27, 1
      %p156 = por %p154, %p155
      %p157 = scmp.ne.s32.totalorder %s146, %s147
      %p158 = scmp.eq.s32.totalorder %s27, 0
      %p159 = por %p157, %p158
      %p160 = scmp.ne.s32.totalorder %s146, %s147
      %p161 = scmp.eq.s32.totalorder %s28, 1
      %p162 = por %p160, %p161
      %p164 = scmp.ne.s32.totalorder %s147, %s163
      %p165 = scmp.eq.s32.totalorder %s28, 0
      %p166 = por %p164, %p165
      %s167 = ssub.s32 %s29, %s48
      %s168 = ssub.s32 %s30, %s44
      %s169 = sor.u32 %s167, %s168
      %p170 = scmp.eq.s32.totalorder %s169, 0
      %s172 = sadd.s32 %s171, 1
      %s173 = scalar_select %p170, %s171, %s172
      %p176 = pneg %p170
      %p177 = scmp.eq.s32.totalorder %s22, 1
      %p178 = por %p176, %p177
      %p179 = scmp.ne.s32.totalorder %s171, %s174
      %p180 = scmp.eq.s32.totalorder %s22, 0
      %p181 = por %p179, %p180
      %p182 = scmp.ne.s32.totalorder %s171, %s174
      %p183 = scmp.eq.s32.totalorder %s27, 1
      %p184 = por %p182, %p183
      %p185 = scmp.ne.s32.totalorder %s174, %s175
      %p186 = scmp.eq.s32.totalorder %s27, 0
      %p187 = por %p185, %p186
      %p188 = scmp.ne.s32.totalorder %s174, %s175
      %p189 = scmp.eq.s32.totalorder %s28, 1
      %p190 = por %p188, %p189
      %p192 = scmp.ne.s32.totalorder %s175, %s191
      %p193 = scmp.eq.s32.totalorder %s28, 0
      %p194 = por %p192, %p193
      %p195 = scmp.le.s32.totalorder 1, %s22
      %p196 = scmp.lt.s32.totalorder %s22, 3
      %p197 = pnand %p195, %p196
      %p198 = pneg %p197
      // Predicated region
      $region9: #{tpu_custom_call.1} parent=5 // pred_check
        _
      $region10: #{tpu_custom_call.1} parent=5 // pred_check_branch
        %200 = sbr.rel (%p197) target = $region12
      $region11: #{tpu_custom_call.1} parent=5 // pred_region
        %s201 = ssub.s32 %s22, 1
      $region12: #{tpu_custom_call.1} parent=5 // pred_fallthru
        _
      %p202 = scmp.lt.s32.totalorder %s22, 2
      // Predicated region
      $region13: #{tpu_custom_call.1} parent=5 // pred_check
        %p203 = pneg %p202
      $region14: #{tpu_custom_call.1} parent=5 // pred_check_branch
        %205 = sbr.rel (%p203) target = $region16
      $region15: #{tpu_custom_call.1} parent=5 // pred_region
        // Predicated region
        $region17: #{tpu_custom_call.1} parent=15 // pred_check
          %p206 = pneg %p63
        $region18: #{tpu_custom_call.1} parent=15 // pred_check_branch
          %208 = sbr.rel (%p206) target = $region20
        $region19: #{tpu_custom_call.1} parent=15 // pred_region
          %s209 = sand.u32 %s53, 1
          %s210 = scalar_lea.sflag [#allocation6], %s209
          %s211 = sand.u32 %s53, 1
          %s212 = smul.addr %s211, 64
          %s213 = scalar_lea.vmem [#allocation5], %s212
          %s214 = smul.u32 4, %s30
          %s216 = ssub.s32 1024, 1024
          %217 = vsyncadd %s210, %s216
          %s218 = smul.addr %s214, 2
          %s219 = smul.addr %s29, 8
          %s220 = sadd.s32 %s218, %s219
          %s221 = smul.addr %s220, 128
          %s222 = scalar_lea.hbm %s0, %s221
          %s223 = sshll.u32 %s213, 4
          %s224 = int_to_ptr.vmem [resolvable:$true] %s223
          %229 = dma.hbm_to_vmem [thread:$0]  %s222, 1024, %s224, %s210, 128, 128, 8
        $region20: #{tpu_custom_call.1} parent=15 // pred_fallthru
          _
        // Predicated region
        $region21: #{tpu_custom_call.1} parent=15 // pred_check
          %p230 = pneg %p93
        $region22: #{tpu_custom_call.1} parent=15 // pred_check_branch
          %232 = sbr.rel (%p230) target = $region24
        $region23: #{tpu_custom_call.1} parent=15 // pred_region
          %s233 = sand.u32 %s22, 1
          %s234 = scalar_lea.sflag [#allocation9], %s233
          %s235 = sand.u32 %s83, 1
          %s236 = smul.addr %s235, 64
          %s237 = scalar_lea.vmem [#allocation8], %s236
          %s238 = smul.u32 4, %s30
          %s239 = smul.u32 2, %s31
          %s241 = ssub.s32 1024, 1024
          %242 = vsyncadd %s234, %s241
          %s243 = smul.addr %s238, 2
          %s244 = sadd.s32 %s239, %s243
          %s245 = smul.addr %s29, 8
          %s246 = sadd.s32 %s244, %s245
          %s247 = smul.addr %s246, 128
          %s248 = scalar_lea.hbm %s1, %s247
          %s249 = sshll.u32 %s237, 4
          %s250 = int_to_ptr.vmem [resolvable:$true] %s249
          %255 = dma.hbm_to_vmem [thread:$0]  %s248, 1024, %s250, %s234, 128, 128, 8
        $region24: #{tpu_custom_call.1} parent=15 // pred_fallthru
          _
        // Predicated region
        $region25: #{tpu_custom_call.1} parent=15 // pred_check
          %p256 = pneg %p123
        $region26: #{tpu_custom_call.1} parent=15 // pred_check_branch
          %258 = sbr.rel (%p256) target = $region28
        $region27: #{tpu_custom_call.1} parent=15 // pred_region
          %s259 = sand.u32 %s22, 1
          %s260 = scalar_lea.sflag [#allocation9], %s259
          %s261 = sand.u32 %s113, 1
          %s262 = smul.addr %s261, 64
          %s263 = scalar_lea.vmem [#allocation10], %s262
          %s264 = smul.u32 4, %s30
          %s265 = smul.u32 2, %s31
          %s267 = ssub.s32 1024, 1024
          %268 = vsyncadd %s260, %s267
          %s269 = smul.addr %s264, 2
          %s270 = sadd.s32 %s265, %s269
          %s271 = smul.addr %s29, 8
          %s272 = sadd.s32 %s270, %s271
          %s273 = smul.addr %s272, 128
          %s274 = scalar_lea.hbm %s2, %s273
          %s275 = sshll.u32 %s263, 4
          %s276 = int_to_ptr.vmem [resolvable:$true] %s275
          %281 = dma.hbm_to_vmem [thread:$0]  %s274, 1024, %s276, %s260, 128, 128, 8
        $region28: #{tpu_custom_call.1} parent=15 // pred_fallthru
          _
        // Predicated region
        $region29: #{tpu_custom_call.1} parent=15 // pred_check
          %p282 = pneg %p153
        $region30: #{tpu_custom_call.1} parent=15 // pred_check_branch
          %284 = sbr.rel (%p282) target = $region32
        $region31: #{tpu_custom_call.1} parent=15 // pred_region
          %s285 = sand.u32 %s143, 1
          %s286 = scalar_lea.sflag [#allocation12], %s285
          %s287 = sand.u32 %s143, 1
          %s288 = smul.addr %s287, 64
          %s289 = scalar_lea.vmem [#allocation11], %s288
          %s290 = smul.u32 4, %s30
          %s292 = ssub.s32 1024, 1024
          %293 = vsyncadd %s286, %s292
          %s294 = smul.addr %s290, 2
          %s295 = sadd.s32 %s31, %s294
          %s296 = smul.addr %s29, 8
          %s297 = sadd.s32 %s295, %s296
          %s298 = smul.addr %s297, 128
          %s299 = scalar_lea.hbm %s3, %s298
          %s300 = sshll.u32 %s289, 4
          %s301 = int_to_ptr.vmem [resolvable:$true] %s300
          %306 = dma.hbm_to_vmem [thread:$0]  %s299, 1024, %s301, %s286, 128, 128, 8
        $region32: #{tpu_custom_call.1} parent=15 // pred_fallthru
          _
      $region16: #{tpu_custom_call.1} parent=5 // pred_fallthru
        _
      %p307 = scmp.le.s32.totalorder 1, %s22
      %p308 = scmp.lt.s32.totalorder %s22, 3
      %p309 = pnand %p307, %p308
      %p310 = pneg %p309
      // Predicated region
      $region33: #{tpu_custom_call.1} parent=5 // pred_check
        _
      $region34: #{tpu_custom_call.1} parent=5 // pred_check_branch
        %312 = sbr.rel (%p309) target = $region36
      $region35: #{tpu_custom_call.1} parent=5 // pred_region
        %s313 = ssub.s32 %s22, 1
        %s314 = sand.u32 %s56, 1
        %s315 = scalar_lea.sflag [#allocation6], %s314
        %s316 = sand.u32 %s56, 1
        %s317 = smul.addr %s316, 64
        %s318 = scalar_lea.vmem [#allocation5], %s317
        // Predicated region
        $region37: #{tpu_custom_call.1} parent=35 // pred_check
          %p319 = pneg %p69
        $region38: #{tpu_custom_call.1} parent=35 // pred_check_branch
          %321 = sbr.rel (%p319) target = $region40
        $region39: #{tpu_custom_call.1} parent=35 // pred_region
          %322 = dma.done %s315, 1024
        $region40: #{tpu_custom_call.1} parent=35 // pred_fallthru
          _
        %s323 = sand.u32 %s27, 1
        %s324 = scalar_lea.sflag [#allocation9], %s323
        %s325 = sand.u32 %s86, 1
        %s326 = smul.addr %s325, 64
        %s327 = scalar_lea.vmem [#allocation8], %s326
        // Predicated region
        $region41: #{tpu_custom_call.1} parent=35 // pred_check
          %p328 = pneg %p99
        $region42: #{tpu_custom_call.1} parent=35 // pred_check_branch
          %330 = sbr.rel (%p328) target = $region44
        $region43: #{tpu_custom_call.1} parent=35 // pred_region
          %331 = dma.done %s324, 1024
        $region44: #{tpu_custom_call.1} parent=35 // pred_fallthru
          _
        %s332 = sand.u32 %s27, 1
        %s333 = scalar_lea.sflag [#allocation9], %s332
        %s334 = sand.u32 %s116, 1
        %s335 = smul.addr %s334, 64
        %s336 = scalar_lea.vmem [#allocation10], %s335
        // Predicated region
        $region45: #{tpu_custom_call.1} parent=35 // pred_check
          %p337 = pneg %p129
        $region46: #{tpu_custom_call.1} parent=35 // pred_check_branch
          %339 = sbr.rel (%p337) target = $region48
        $region47: #{tpu_custom_call.1} parent=35 // pred_region
          %340 = dma.done %s333, 1024
        $region48: #{tpu_custom_call.1} parent=35 // pred_fallthru
          _
        %s341 = sand.u32 %s146, 1
        %s342 = scalar_lea.sflag [#allocation12], %s341
        %s343 = sand.u32 %s146, 1
        %s344 = smul.addr %s343, 64
        %s345 = scalar_lea.vmem [#allocation11], %s344
        // Predicated region
        $region49: #{tpu_custom_call.1} parent=35 // pred_check
          %p346 = pneg %p159
        $region50: #{tpu_custom_call.1} parent=35 // pred_check_branch
          %348 = sbr.rel (%p346) target = $region52
        $region51: #{tpu_custom_call.1} parent=35 // pred_region
          %349 = dma.done %s342, 1024
        $region52: #{tpu_custom_call.1} parent=35 // pred_fallthru
          _
        %s350 = sand.u32 %s56, 1
        %s351 = scalar_lea.sflag [#allocation6], %s350
        %s352 = sand.u32 %s56, 1
        %s353 = smul.addr %s352, 64
        %s354 = scalar_lea.vmem [#allocation5], %s353
        %p355 = pneg %p69
        %p356 = pneg %p66
        %s357 = sand.u32 %s27, 1
        %s358 = scalar_lea.sflag [#allocation9], %s357
        %s359 = sand.u32 %s86, 1
        %s360 = smul.addr %s359, 64
        %s361 = scalar_lea.vmem [#allocation8], %s360
        %p362 = pneg %p99
        %p363 = pneg %p96
        %s364 = sand.u32 %s27, 1
        %s365 = scalar_lea.sflag [#allocation9], %s364
        %s366 = sand.u32 %s116, 1
        %s367 = smul.addr %s366, 64
        %s368 = scalar_lea.vmem [#allocation10], %s367
        %p369 = pneg %p129
        %p370 = pneg %p126
        %s371 = sand.u32 %s146, 1
        %s372 = scalar_lea.sflag [#allocation12], %s371
        %s373 = sand.u32 %s146, 1
        %s374 = smul.addr %s373, 64
        %s375 = scalar_lea.vmem [#allocation11], %s374
        %p376 = pneg %p159
        %p377 = pneg %p156
        %p378 = pneg %p187
        %p379 = pneg %p184
        %s380 = sand.u32 %s174, 1
        %s381 = scalar_lea.sflag [#allocation7], %s380
        %s382 = sand.u32 %s174, 1
        %s383 = smul.addr %s382, 64
        %s384 = scalar_lea.vmem [#allocation13], %s383
        %s385 = smul.u32 4, %s33
        %s386 = smul.u32 4, %s33
        %s387 = smul.u32 2, %s34
        %s388 = smul.u32 4, %s33
        %s389 = smul.u32 2, %s34
        %s390 = smul.u32 4, %s33
        %s391 = smul.u32 4, %s33
        %p393 = scmp.eq.s32.totalorder %s34, 0
        // Predicated region
        $region53: #{tpu_custom_call.1} parent=35 // pred_check
          %p394 = pneg %p393
        $region54: #{tpu_custom_call.1} parent=35 // pred_check_branch
          %396 = sbr.rel (%p394) target = $region56
        $region55: #{tpu_custom_call.1} parent=35 // pred_region
          %vm397 = vcmask 7168
          %398 = vst.msk [vmem:[#allocation2] sm:$0xff] %vm397, -inf
          %399 = vst.msk [vmem:[#allocation2 + $0x8] sm:$0xff] %vm397, -inf
          %400 = vst.msk [vmem:[#allocation2 + $0x10] sm:$0xff] %vm397, -inf
          %401 = vst.msk [vmem:[#allocation2 + $0x18] sm:$0xff] %vm397, -inf
          %402 = vst.msk [vmem:[#allocation2 + $0x20] sm:$0xff] %vm397, -inf
          %403 = vst.msk [vmem:[#allocation2 + $0x28] sm:$0xff] %vm397, -inf
          %404 = vst.msk [vmem:[#allocation2 + $0x30] sm:$0xff] %vm397, -inf
          %405 = vst.msk [vmem:[#allocation2 + $0x38] sm:$0xff] %vm397, -inf
          %406 = vst.msk [vmem:[#allocation3] sm:$0xff] %vm397, 0.0
          %407 = vst.msk [vmem:[#allocation3 + $0x8] sm:$0xff] %vm397, 0.0
          %408 = vst.msk [vmem:[#allocation3 + $0x10] sm:$0xff] %vm397, 0.0
          %409 = vst.msk [vmem:[#allocation3 + $0x18] sm:$0xff] %vm397, 0.0
          %410 = vst.msk [vmem:[#allocation3 + $0x20] sm:$0xff] %vm397, 0.0
          %411 = vst.msk [vmem:[#allocation3 + $0x28] sm:$0xff] %vm397, 0.0
          %412 = vst.msk [vmem:[#allocation3 + $0x30] sm:$0xff] %vm397, 0.0
          %413 = vst.msk [vmem:[#allocation3 + $0x38] sm:$0xff] %vm397, 0.0
          %vm414 = vcmask 261120
          %415 = vst.msk [vmem:[#allocation4] sm:$0xff] %vm414, 0.0
          %416 = vst.msk [vmem:[#allocation4 + $0x8] sm:$0xff] %vm414, 0.0
          %417 = vst.msk [vmem:[#allocation4 + $0x10] sm:$0xff] %vm414, 0.0
          %418 = vst.msk [vmem:[#allocation4 + $0x18] sm:$0xff] %vm414, 0.0
          %419 = vst.msk [vmem:[#allocation4 + $0x20] sm:$0xff] %vm414, 0.0
          %420 = vst.msk [vmem:[#allocation4 + $0x28] sm:$0xff] %vm414, 0.0
          %421 = vst.msk [vmem:[#allocation4 + $0x30] sm:$0xff] %vm414, 0.0
          %422 = vst.msk [vmem:[#allocation4 + $0x38] sm:$0xff] %vm414, 0.0
        $region56: #{tpu_custom_call.1} parent=35 // pred_fallthru
          _
        %v423 = vld [vmem:[%s318] sm:$0xff]
        %v424 = vld [vmem:[%s318 + $0x8] sm:$0xff]
        %v425 = vld [vmem:[%s318 + $0x10] sm:$0xff]
        %v426 = vld [vmem:[%s318 + $0x18] sm:$0xff]
        %v427 = vld [vmem:[%s318 + $0x20] sm:$0xff]
        %v428 = vld [vmem:[%s318 + $0x28] sm:$0xff]
        %v429 = vld [vmem:[%s318 + $0x30] sm:$0xff]
        %v430 = vld [vmem:[%s318 + $0x38] sm:$0xff]
        %v431 = vmul.f32 %v423, 0.17677669
        %v432 = vmul.f32 %v424, 0.17677669
        %v433 = vmul.f32 %v425, 0.17677669
        %v434 = vmul.f32 %v426, 0.17677669
        %v435 = vmul.f32 %v427, 0.17677669
        %v436 = vmul.f32 %v428, 0.17677669
        %v437 = vmul.f32 %v429, 0.17677669
        %v438 = vmul.f32 %v430, 0.17677669
        %v439 = vpack.c.bf16 %v432, %v431
        %v440 = vpack.c.bf16 %v434, %v433
        %v441 = vpack.c.bf16 %v436, %v435
        %v442 = vpack.c.bf16 %v438, %v437
        %v443 = vld [vmem:[%s327] sm:$0xff]
        %v444 = vld [vmem:[%s327 + $0x8] sm:$0xff]
        %v445 = vld [vmem:[%s327 + $0x10] sm:$0xff]
        %v446 = vld [vmem:[%s327 + $0x18] sm:$0xff]
        %v447 = vld [vmem:[%s327 + $0x20] sm:$0xff]
        %v448 = vld [vmem:[%s327 + $0x28] sm:$0xff]
        %v449 = vld [vmem:[%s327 + $0x30] sm:$0xff]
        %v450 = vld [vmem:[%s327 + $0x38] sm:$0xff]
        %v451 = vpack.c.bf16 %v444, %v443
        %v452 = vpack.c.bf16 %v446, %v445
        %v453 = vpack.c.bf16 %v448, %v447
        %v454 = vpack.c.bf16 %v450, %v449
        %v455 = vld [vmem:[%s336] sm:$0xff]
        %v456 = vld [vmem:[%s336 + $0x8] sm:$0xff]
        %v457 = vld [vmem:[%s336 + $0x10] sm:$0xff]
        %v458 = vld [vmem:[%s336 + $0x18] sm:$0xff]
        %v459 = vld [vmem:[%s336 + $0x20] sm:$0xff]
        %v460 = vld [vmem:[%s336 + $0x28] sm:$0xff]
        %v461 = vld [vmem:[%s336 + $0x30] sm:$0xff]
        %v462 = vld [vmem:[%s336 + $0x38] sm:$0xff]
        %v463 = vpack.c.bf16 %v456, %v455
        %v464 = vpack.c.bf16 %v458, %v457
        %v465 = vpack.c.bf16 %v460, %v459
        %v466 = vpack.c.bf16 %v462, %v461
        %v467 = vld [vmem:[%s345] sm:$0xff]
        %v468 = vld [vmem:[%s345 + $0x8] sm:$0xff]
        %v469 = vld [vmem:[%s345 + $0x10] sm:$0xff]
        %v470 = vld [vmem:[%s345 + $0x18] sm:$0xff]
        %v471 = vld [vmem:[%s345 + $0x20] sm:$0xff]
        %v472 = vld [vmem:[%s345 + $0x28] sm:$0xff]
        %v473 = vld [vmem:[%s345 + $0x30] sm:$0xff]
        %v474 = vld [vmem:[%s345 + $0x38] sm:$0xff]
        %vm475 = vcmask 261120
        %v477 = vsel %vm475, %v439, 0
        %v480 = vsel %vm475, %v451, 0
        %482 = vmatprep.subr.bf16.mxu0 0
        %483 = vmatpush1.bf16.xpose.msra.mxu0 %v480
        %484 = vmatprep.subr.bf16.mxu0 0
        %485 = vmatpush1.bf16.xpose.msra.mxu0 0
        %486 = vmatprep.subr.bf16.mxu0 0
        %487 = vmatpush1.bf16.xpose.msra.mxu0 0
        %488 = vmatprep.subr.bf16.mxu0 0
        %489 = vmatpush1.bf16.xpose.msra.mxu0 0
        %490 = vmatprep.subr.bf16.mxu0 0
        %491 = vmatpush1.bf16.xpose.msra.mxu0 0
        %492 = vmatprep.subr.bf16.mxu0 0
        %493 = vmatpush1.bf16.xpose.msra.mxu0 0
        %494 = vmatprep.subr.bf16.mxu0 0
        %495 = vmatpush1.bf16.xpose.msra.mxu0 0
        %496 = vmatprep.subr.bf16.mxu0 0
        %497 = vmatpush1.bf16.xpose.msra.mxu0 0
        %498 = vmatprep.subr.bf16.mxu0 0
        %499 = vmatpush1.bf16.xpose.msra.mxu0 0
        %500 = vmatprep.subr.bf16.mxu0 0
        %501 = vmatpush1.bf16.xpose.msra.mxu0 0
        %502 = vmatprep.subr.bf16.mxu0 0
        %503 = vmatpush1.bf16.xpose.msra.mxu0 0
        %504 = vmatprep.subr.bf16.mxu0 0
        %505 = vmatpush1.bf16.xpose.msra.mxu0 0
        %506 = vmatprep.subr.bf16.mxu0 0
        %507 = vmatpush1.bf16.xpose.msra.mxu0 0
        %508 = vmatprep.subr.bf16.mxu0 0
        %509 = vmatpush1.bf16.xpose.msra.mxu0 0
        %510 = vmatprep.subr.bf16.mxu0 0
        %511 = vmatpush1.bf16.xpose.msra.mxu0 0
        %512 = vmatprep.subr.bf16.mxu0 0
        %513 = vmatpush1.bf16.xpose.msra.mxu0 0
        %514 = vmatprep.mubr.bf16.mxu0 0
        %515 = vmatmul.mubr.bf16.gmra.mrb[0].mxu0 %v477
        %v516 = vpop.f32.mrb[0].mxu0
        %v517 = vadd.f32 %v467, %v516
        %v518 = vpop.f32.mrb[0].mxu0
        %v519 = vpop.f32.mrb[0].mxu0
        %v520 = vadd.f32 %v468, %v519
        %v521 = vpop.f32.mrb[0].mxu0
        %522 = vdwg.mxu0
        %v524 = vsel %vm475, %v440, 0
        %v527 = vsel %vm475, %v452, 0
        %529 = vmatprep.subr.bf16.mxu0 0
        %530 = vmatpush1.bf16.xpose.msra.mxu0 %v527
        %531 = vmatprep.subr.bf16.mxu0 0
        %532 = vmatpush1.bf16.xpose.msra.mxu0 0
        %533 = vmatprep.subr.bf16.mxu0 0
        %534 = vmatpush1.bf16.xpose.msra.mxu0 0
        %535 = vmatprep.subr.bf16.mxu0 0
        %536 = vmatpush1.bf16.xpose.msra.mxu0 0
        %537 = vmatprep.subr.bf16.mxu0 0
        %538 = vmatpush1.bf16.xpose.msra.mxu0 0
        %539 = vmatprep.subr.bf16.mxu0 0
        %540 = vmatpush1.bf16.xpose.msra.mxu0 0
        %541 = vmatprep.subr.bf16.mxu0 0
        %542 = vmatpush1.bf16.xpose.msra.mxu0 0
        %543 = vmatprep.subr.bf16.mxu0 0
        %544 = vmatpush1.bf16.xpose.msra.mxu0 0
        %545 = vmatprep.subr.bf16.mxu0 0
        %546 = vmatpush1.bf16.xpose.msra.mxu0 0
        %547 = vmatprep.subr.bf16.mxu0 0
        %548 = vmatpush1.bf16.xpose.msra.mxu0 0
        %549 = vmatprep.subr.bf16.mxu0 0
        %550 = vmatpush1.bf16.xpose.msra.mxu0 0
        %551 = vmatprep.subr.bf16.mxu0 0
        %552 = vmatpush1.bf16.xpose.msra.mxu0 0
        %553 = vmatprep.subr.bf16.mxu0 0
        %554 = vmatpush1.bf16.xpose.msra.mxu0 0
        %555 = vmatprep.subr.bf16.mxu0 0
        %556 = vmatpush1.bf16.xpose.msra.mxu0 0
        %557 = vmatprep.subr.bf16.mxu0 0
        %558 = vmatpush1.bf16.xpose.msra.mxu0 0
        %559 = vmatprep.subr.bf16.mxu0 0
        %560 = vmatpush1.bf16.xpose.msra.mxu0 0
        %561 = vmatprep.mubr.bf16.mxu0 0
        %562 = vmatmul.mubr.bf16.gmra.mrb[0].mxu0 %v524
        %v563 = vpop.f32.mrb[0].mxu0
        %v564 = vadd.f32 %v469, %v563
        %v565 = vpop.f32.mrb[0].mxu0
        %v566 = vpop.f32.mrb[0].mxu0
        %v567 = vadd.f32 %v470, %v566
        %v568 = vpop.f32.mrb[0].mxu0
        %569 = vdwg.mxu0
        %v571 = vsel %vm475, %v441, 0
        %v574 = vsel %vm475, %v453, 0
        %576 = vmatprep.subr.bf16.mxu0 0
        %577 = vmatpush1.bf16.xpose.msra.mxu0 %v574
        %578 = vmatprep.subr.bf16.mxu0 0
        %579 = vmatpush1.bf16.xpose.msra.mxu0 0
        %580 = vmatprep.subr.bf16.mxu0 0
        %581 = vmatpush1.bf16.xpose.msra.mxu0 0
        %582 = vmatprep.subr.bf16.mxu0 0
        %583 = vmatpush1.bf16.xpose.msra.mxu0 0
        %584 = vmatprep.subr.bf16.mxu0 0
        %585 = vmatpush1.bf16.xpose.msra.mxu0 0
        %586 = vmatprep.subr.bf16.mxu0 0
        %587 = vmatpush1.bf16.xpose.msra.mxu0 0
        %588 = vmatprep.subr.bf16.mxu0 0
        %589 = vmatpush1.bf16.xpose.msra.mxu0 0
        %590 = vmatprep.subr.bf16.mxu0 0
        %591 = vmatpush1.bf16.xpose.msra.mxu0 0
        %592 = vmatprep.subr.bf16.mxu0 0
        %593 = vmatpush1.bf16.xpose.msra.mxu0 0
        %594 = vmatprep.subr.bf16.mxu0 0
        %595 = vmatpush1.bf16.xpose.msra.mxu0 0
        %596 = vmatprep.subr.bf16.mxu0 0
        %597 = vmatpush1.bf16.xpose.msra.mxu0 0
        %598 = vmatprep.subr.bf16.mxu0 0
        %599 = vmatpush1.bf16.xpose.msra.mxu0 0
        %600 = vmatprep.subr.bf16.mxu0 0
        %601 = vmatpush1.bf16.xpose.msra.mxu0 0
        %602 = vmatprep.subr.bf16.mxu0 0
        %603 = vmatpush1.bf16.xpose.msra.mxu0 0
        %604 = vmatprep.subr.bf16.mxu0 0
        %605 = vmatpush1.bf16.xpose.msra.mxu0 0
        %606 = vmatprep.subr.bf16.mxu0 0
        %607 = vmatpush1.bf16.xpose.msra.mxu0 0
        %608 = vmatprep.mubr.bf16.mxu0 0
        %609 = vmatmul.mubr.bf16.gmra.mrb[0].mxu0 %v571
        %v610 = vpop.f32.mrb[0].mxu0
        %v611 = vadd.f32 %v471, %v610
        %v612 = vpop.f32.mrb[0].mxu0
        %v613 = vpop.f32.mrb[0].mxu0
        %v614 = vadd.f32 %v472, %v613
        %v615 = vpop.f32.mrb[0].mxu0
        %616 = vdwg.mxu0
        %v618 = vsel %vm475, %v442, 0
        %v621 = vsel %vm475, %v454, 0
        %623 = vmatprep.subr.bf16.mxu0 0
        %624 = vmatpush1.bf16.xpose.msra.mxu0 %v621
        %625 = vmatprep.subr.bf16.mxu0 0
        %626 = vmatpush1.bf16.xpose.msra.mxu0 0
        %627 = vmatprep.subr.bf16.mxu0 0
        %628 = vmatpush1.bf16.xpose.msra.mxu0 0
        %629 = vmatprep.subr.bf16.mxu0 0
        %630 = vmatpush1.bf16.xpose.msra.mxu0 0
        %631 = vmatprep.subr.bf16.mxu0 0
        %632 = vmatpush1.bf16.xpose.msra.mxu0 0
        %633 = vmatprep.subr.bf16.mxu0 0
        %634 = vmatpush1.bf16.xpose.msra.mxu0 0
        %635 = vmatprep.subr.bf16.mxu0 0
        %636 = vmatpush1.bf16.xpose.msra.mxu0 0
        %637 = vmatprep.subr.bf16.mxu0 0
        %638 = vmatpush1.bf16.xpose.msra.mxu0 0
        %639 = vmatprep.subr.bf16.mxu0 0
        %640 = vmatpush1.bf16.xpose.msra.mxu0 0
        %641 = vmatprep.subr.bf16.mxu0 0
        %642 = vmatpush1.bf16.xpose.msra.mxu0 0
        %643 = vmatprep.subr.bf16.mxu0 0
        %644 = vmatpush1.bf16.xpose.msra.mxu0 0
        %645 = vmatprep.subr.bf16.mxu0 0
        %646 = vmatpush1.bf16.xpose.msra.mxu0 0
        %647 = vmatprep.subr.bf16.mxu0 0
        %648 = vmatpush1.bf16.xpose.msra.mxu0 0
        %649 = vmatprep.subr.bf16.mxu0 0
        %650 = vmatpush1.bf16.xpose.msra.mxu0 0
        %651 = vmatprep.subr.bf16.mxu0 0
        %652 = vmatpush1.bf16.xpose.msra.mxu0 0
        %653 = vmatprep.subr.bf16.mxu0 0
        %654 = vmatpush1.bf16.xpose.msra.mxu0 0
        %655 = vmatprep.mubr.bf16.mxu0 0
        %656 = vmatmul.mubr.bf16.gmra.mrb[0].mxu0 %v618
        %v657 = vpop.f32.mrb[0].mxu0
        %v658 = vadd.f32 %v473, %v657
        %v659 = vpop.f32.mrb[0].mxu0
        %v660 = vpop.f32.mrb[0].mxu0
        %v661 = vadd.f32 %v474, %v660
        %v662 = vpop.f32.mrb[0].mxu0
        %663 = vdwg.mxu0
        %v664 = vld [vmem:[#allocation2] sm:$0xff]
        %v665 = vld [vmem:[#allocation2 + $0x8] sm:$0xff]
        %v666 = vld [vmem:[#allocation2 + $0x10] sm:$0xff]
        %v667 = vld [vmem:[#allocation2 + $0x18] sm:$0xff]
        %v668 = vld [vmem:[#allocation2 + $0x20] sm:$0xff]
        %v669 = vld [vmem:[#allocation2 + $0x28] sm:$0xff]
        %v670 = vld [vmem:[#allocation2 + $0x30] sm:$0xff]
        %v671 = vld [vmem:[#allocation2 + $0x38] sm:$0xff]
        %vm672 = vcmask 130048
        %v673 = vsel %vm672, %v517, -inf
        %674 = vmax.xlane.f32.xlu0 %v673
        %v675 = vpop.xlane.xlu0 %674
        %v676 = vsel %vm672, %v520, -inf
        %677 = vmax.xlane.f32.xlu0 %v676
        %v678 = vpop.xlane.xlu0 %677
        %v679 = vsel %vm672, %v564, -inf
        %680 = vmax.xlane.f32.xlu0 %v679
        %v681 = vpop.xlane.xlu0 %680
        %v682 = vsel %vm672, %v567, -inf
        %683 = vmax.xlane.f32.xlu0 %v682
        %v684 = vpop.xlane.xlu0 %683
        %v685 = vsel %vm672, %v611, -inf
        %686 = vmax.xlane.f32.xlu0 %v685
        %v687 = vpop.xlane.xlu0 %686
        %v688 = vsel %vm672, %v614, -inf
        %689 = vmax.xlane.f32.xlu0 %v688
        %v690 = vpop.xlane.xlu0 %689
        %v691 = vsel %vm672, %v658, -inf
        %692 = vmax.xlane.f32.xlu0 %v691
        %v693 = vpop.xlane.xlu0 %692
        %v694 = vsel %vm672, %v661, -inf
        %695 = vmax.xlane.f32.xlu0 %v694
        %v696 = vpop.xlane.xlu0 %695
        %v697 = vmax.f32 %v664, %v675
        %v698 = vmax.f32 %v665, %v678
        %v699 = vmax.f32 %v666, %v681
        %v700 = vmax.f32 %v667, %v684
        %v701 = vmax.f32 %v668, %v687
        %v702 = vmax.f32 %v669, %v690
        %v703 = vmax.f32 %v670, %v693
        %v704 = vmax.f32 %v671, %v696
        %v705 = vsub.f32 %v664, %v697
        %v706 = vsub.f32 %v665, %v698
        %v707 = vsub.f32 %v666, %v699
        %v708 = vsub.f32 %v667, %v700
        %v709 = vsub.f32 %v668, %v701
        %v710 = vsub.f32 %v669, %v702
        %v711 = vsub.f32 %v670, %v703
        %v712 = vsub.f32 %v671, %v704
        %v713 = vmul.f32 %v705, 1.442695
        %v714 = vpow.pop %v713
        %v715 = vmul.f32 %v706, 1.442695
        %v716 = vpow.pop %v715
        %v717 = vmul.f32 %v707, 1.442695
        %v718 = vpow.pop %v717
        %v719 = vmul.f32 %v708, 1.442695
        %v720 = vpow.pop %v719
        %v721 = vmul.f32 %v709, 1.442695
        %v722 = vpow.pop %v721
        %v723 = vmul.f32 %v710, 1.442695
        %v724 = vpow.pop %v723
        %v725 = vmul.f32 %v711, 1.442695
        %v726 = vpow.pop %v725
        %v727 = vmul.f32 %v712, 1.442695
        %v728 = vpow.pop %v727
        %730 = vset.pattern.permute.xlu0 0
        %731 = vperm.xlu0 %730, %v697
        %v732 = vpop.permute.xlu0 %731
        %735 = vset.pattern.permute.xlu0 0
        %736 = vperm.xlu0 %735, %v698
        %v737 = vpop.permute.xlu0 %736
        %740 = vset.pattern.permute.xlu0 0
        %741 = vperm.xlu0 %740, %v699
        %v742 = vpop.permute.xlu0 %741
        %745 = vset.pattern.permute.xlu0 0
        %746 = vperm.xlu0 %745, %v700
        %v747 = vpop.permute.xlu0 %746
        %750 = vset.pattern.permute.xlu0 0
        %751 = vperm.xlu0 %750, %v701
        %v752 = vpop.permute.xlu0 %751
        %755 = vset.pattern.permute.xlu0 0
        %756 = vperm.xlu0 %755, %v702
        %v757 = vpop.permute.xlu0 %756
        %760 = vset.pattern.permute.xlu0 0
        %761 = vperm.xlu0 %760, %v703
        %v762 = vpop.permute.xlu0 %761
        %765 = vset.pattern.permute.xlu0 0
        %766 = vperm.xlu0 %765, %v704
        %v767 = vpop.permute.xlu0 %766
        %v769 = vsub.f32 %v517, %v732
        %v770 = vsub.f32 %v520, %v737
        %v771 = vsub.f32 %v564, %v742
        %v772 = vsub.f32 %v567, %v747
        %v773 = vsub.f32 %v611, %v752
        %v774 = vsub.f32 %v614, %v757
        %v775 = vsub.f32 %v658, %v762
        %v776 = vsub.f32 %v661, %v767
        %v777 = vmul.f32 %v769, 1.442695
        %v778 = vpow.pop %v777
        %v779 = vmul.f32 %v770, 1.442695
        %v780 = vpow.pop %v779
        %v781 = vmul.f32 %v771, 1.442695
        %v782 = vpow.pop %v781
        %v783 = vmul.f32 %v772, 1.442695
        %v784 = vpow.pop %v783
        %v785 = vmul.f32 %v773, 1.442695
        %v786 = vpow.pop %v785
        %v787 = vmul.f32 %v774, 1.442695
        %v788 = vpow.pop %v787
        %v789 = vmul.f32 %v775, 1.442695
        %v790 = vpow.pop %v789
        %v791 = vmul.f32 %v776, 1.442695
        %v792 = vpow.pop %v791
        %v793 = vld [vmem:[#allocation3] sm:$0xff]
        %v794 = vld [vmem:[#allocation3 + $0x8] sm:$0xff]
        %v795 = vld [vmem:[#allocation3 + $0x10] sm:$0xff]
        %v796 = vld [vmem:[#allocation3 + $0x18] sm:$0xff]
        %v797 = vld [vmem:[#allocation3 + $0x20] sm:$0xff]
        %v798 = vld [vmem:[#allocation3 + $0x28] sm:$0xff]
        %v799 = vld [vmem:[#allocation3 + $0x30] sm:$0xff]
        %v800 = vld [vmem:[#allocation3 + $0x38] sm:$0xff]
        %v801 = vmul.f32 %v714, %v793
        %v802 = vmul.f32 %v716, %v794
        %v803 = vmul.f32 %v718, %v795
        %v804 = vmul.f32 %v720, %v796
        %v805 = vmul.f32 %v722, %v797
        %v806 = vmul.f32 %v724, %v798
        %v807 = vmul.f32 %v726, %v799
        %v808 = vmul.f32 %v728, %v800
        %v809 = vsel %vm672, %v778, 0.0
        %810 = vadd.xlane.f32.xlu0 %v809
        %v811 = vpop.xlane.xlu0 %810
        %v812 = vsel %vm672, %v780, 0.0
        %813 = vadd.xlane.f32.xlu0 %v812
        %v814 = vpop.xlane.xlu0 %813
        %v815 = vsel %vm672, %v782, 0.0
        %816 = vadd.xlane.f32.xlu0 %v815
        %v817 = vpop.xlane.xlu0 %816
        %v818 = vsel %vm672, %v784, 0.0
        %819 = vadd.xlane.f32.xlu0 %v818
        %v820 = vpop.xlane.xlu0 %819
        %v821 = vsel %vm672, %v786, 0.0
        %822 = vadd.xlane.f32.xlu0 %v821
        %v823 = vpop.xlane.xlu0 %822
        %v824 = vsel %vm672, %v788, 0.0
        %825 = vadd.xlane.f32.xlu0 %v824
        %v826 = vpop.xlane.xlu0 %825
        %v827 = vsel %vm672, %v790, 0.0
        %828 = vadd.xlane.f32.xlu0 %v827
        %v829 = vpop.xlane.xlu0 %828
        %v830 = vsel %vm672, %v792, 0.0
        %831 = vadd.xlane.f32.xlu0 %v830
        %v832 = vpop.xlane.xlu0 %831
        %v833 = vadd.f32 %v801, %v811
        %v834 = vadd.f32 %v802, %v814
        %v835 = vadd.f32 %v803, %v817
        %v836 = vadd.f32 %v804, %v820
        %v837 = vadd.f32 %v805, %v823
        %v838 = vadd.f32 %v806, %v826
        %v839 = vadd.f32 %v807, %v829
        %v840 = vadd.f32 %v808, %v832
        %vm841 = vcmask 7168
        %842 = vst.msk [vmem:[#allocation3] sm:$0xff] %vm841, %v833
        %843 = vst.msk [vmem:[#allocation3 + $0x8] sm:$0xff] %vm841, %v834
        %844 = vst.msk [vmem:[#allocation3 + $0x10] sm:$0xff] %vm841, %v835
        %845 = vst.msk [vmem:[#allocation3 + $0x18] sm:$0xff] %vm841, %v836
        %846 = vst.msk [vmem:[#allocation3 + $0x20] sm:$0xff] %vm841, %v837
        %847 = vst.msk [vmem:[#allocation3 + $0x28] sm:$0xff] %vm841, %v838
        %848 = vst.msk [vmem:[#allocation3 + $0x30] sm:$0xff] %vm841, %v839
        %849 = vst.msk [vmem:[#allocation3 + $0x38] sm:$0xff] %vm841, %v840
        %v850 = vld [vmem:[#allocation4] sm:$0xff]
        %v851 = vld [vmem:[#allocation4 + $0x8] sm:$0xff]
        %v852 = vld [vmem:[#allocation4 + $0x10] sm:$0xff]
        %v853 = vld [vmem:[#allocation4 + $0x18] sm:$0xff]
        %v854 = vld [vmem:[#allocation4 + $0x20] sm:$0xff]
        %v855 = vld [vmem:[#allocation4 + $0x28] sm:$0xff]
        %v856 = vld [vmem:[#allocation4 + $0x30] sm:$0xff]
        %v857 = vld [vmem:[#allocation4 + $0x38] sm:$0xff]
        %859 = vset.pattern.permute.xlu0 0
        %860 = vperm.xlu0 %859, %v714
        %v861 = vpop.permute.xlu0 %860
        %864 = vset.pattern.permute.xlu0 0
        %865 = vperm.xlu0 %864, %v716
        %v866 = vpop.permute.xlu0 %865
        %869 = vset.pattern.permute.xlu0 0
        %870 = vperm.xlu0 %869, %v718
        %v871 = vpop.permute.xlu0 %870
        %874 = vset.pattern.permute.xlu0 0
        %875 = vperm.xlu0 %874, %v720
        %v876 = vpop.permute.xlu0 %875
        %879 = vset.pattern.permute.xlu0 0
        %880 = vperm.xlu0 %879, %v722
        %v881 = vpop.permute.xlu0 %880
        %884 = vset.pattern.permute.xlu0 0
        %885 = vperm.xlu0 %884, %v724
        %v886 = vpop.permute.xlu0 %885
        %889 = vset.pattern.permute.xlu0 0
        %890 = vperm.xlu0 %889, %v726
        %v891 = vpop.permute.xlu0 %890
        %894 = vset.pattern.permute.xlu0 0
        %895 = vperm.xlu0 %894, %v728
        %v896 = vpop.permute.xlu0 %895
        %v898 = vmul.f32 %v861, %v850
        %v899 = vmul.f32 %v866, %v851
        %v900 = vmul.f32 %v871, %v852
        %v901 = vmul.f32 %v876, %v853
        %v902 = vmul.f32 %v881, %v854
        %v903 = vmul.f32 %v886, %v855
        %v904 = vmul.f32 %v891, %v856
        %v905 = vmul.f32 %v896, %v857
        %v906 = vpack.c.bf16 %v780, %v778
        %v907 = vpack.c.bf16 %v784, %v782
        %v908 = vpack.c.bf16 %v788, %v786
        %v909 = vpack.c.bf16 %v792, %v790
        %v911 = vsel %vm672, %v906, 0
        %913 = vmatprep.subr.bf16.mxu0 0
        %914 = vmatpush1.bf16.msra.mxu0 %v463
        %915 = vmatprep.subr.bf16.mxu0 0
        %916 = vmatpush1.bf16.msra.mxu0 0
        %917 = vmatprep.subr.bf16.mxu0 0
        %918 = vmatpush1.bf16.msra.mxu0 0
        %919 = vmatprep.subr.bf16.mxu0 0
        %920 = vmatpush1.bf16.msra.mxu0 0
        %921 = vmatprep.subr.bf16.mxu0 0
        %922 = vmatpush1.bf16.msra.mxu0 0
        %923 = vmatprep.subr.bf16.mxu0 0
        %924 = vmatpush1.bf16.msra.mxu0 0
        %925 = vmatprep.subr.bf16.mxu0 0
        %926 = vmatpush1.bf16.msra.mxu0 0
        %927 = vmatprep.subr.bf16.mxu0 0
        %928 = vmatpush1.bf16.msra.mxu0 0
        %929 = vmatprep.subr.bf16.mxu0 0
        %930 = vmatpush1.bf16.msra.mxu0 0
        %931 = vmatprep.subr.bf16.mxu0 0
        %932 = vmatpush1.bf16.msra.mxu0 0
        %933 = vmatprep.subr.bf16.mxu0 0
        %934 = vmatpush1.bf16.msra.mxu0 0
        %935 = vmatprep.subr.bf16.mxu0 0
        %936 = vmatpush1.bf16.msra.mxu0 0
        %937 = vmatprep.subr.bf16.mxu0 0
        %938 = vmatpush1.bf16.msra.mxu0 0
        %939 = vmatprep.subr.bf16.mxu0 0
        %940 = vmatpush1.bf16.msra.mxu0 0
        %941 = vmatprep.subr.bf16.mxu0 0
        %942 = vmatpush1.bf16.msra.mxu0 0
        %943 = vmatprep.subr.bf16.mxu0 0
        %944 = vmatpush1.bf16.msra.mxu0 0
        %945 = vmatprep.mubr.bf16.mxu0 0
        %946 = vmatmul.mubr.bf16.gmra.mrb[0].mxu0 %v911
        %v947 = vpop.f32.mrb[0].mxu0
        %v948 = vadd.f32 0.0, %v947
        %v949 = vpop.f32.mrb[0].mxu0
        %v950 = vpop.f32.mrb[0].mxu0
        %v951 = vadd.f32 0.0, %v950
        %v952 = vpop.f32.mrb[0].mxu0
        %953 = vdwg.mxu0
        %v955 = vsel %vm672, %v907, 0
        %957 = vmatprep.subr.bf16.mxu0 0
        %958 = vmatpush1.bf16.msra.mxu0 %v464
        %959 = vmatprep.subr.bf16.mxu0 0
        %960 = vmatpush1.bf16.msra.mxu0 0
        %961 = vmatprep.subr.bf16.mxu0 0
        %962 = vmatpush1.bf16.msra.mxu0 0
        %963 = vmatprep.subr.bf16.mxu0 0
        %964 = vmatpush1.bf16.msra.mxu0 0
        %965 = vmatprep.subr.bf16.mxu0 0
        %966 = vmatpush1.bf16.msra.mxu0 0
        %967 = vmatprep.subr.bf16.mxu0 0
        %968 = vmatpush1.bf16.msra.mxu0 0
        %969 = vmatprep.subr.bf16.mxu0 0
        %970 = vmatpush1.bf16.msra.mxu0 0
        %971 = vmatprep.subr.bf16.mxu0 0
        %972 = vmatpush1.bf16.msra.mxu0 0
        %973 = vmatprep.subr.bf16.mxu0 0
        %974 = vmatpush1.bf16.msra.mxu0 0
        %975 = vmatprep.subr.bf16.mxu0 0
        %976 = vmatpush1.bf16.msra.mxu0 0
        %977 = vmatprep.subr.bf16.mxu0 0
        %978 = vmatpush1.bf16.msra.mxu0 0
        %979 = vmatprep.subr.bf16.mxu0 0
        %980 = vmatpush1.bf16.msra.mxu0 0
        %981 = vmatprep.subr.bf16.mxu0 0
        %982 = vmatpush1.bf16.msra.mxu0 0
        %983 = vmatprep.subr.bf16.mxu0 0
        %984 = vmatpush1.bf16.msra.mxu0 0
        %985 = vmatprep.subr.bf16.mxu0 0
        %986 = vmatpush1.bf16.msra.mxu0 0
        %987 = vmatprep.subr.bf16.mxu0 0
        %988 = vmatpush1.bf16.msra.mxu0 0
        %989 = vmatprep.mubr.bf16.mxu0 0
        %990 = vmatmul.mubr.bf16.gmra.mrb[0].mxu0 %v955
        %v991 = vpop.f32.mrb[0].mxu0
        %v992 = vadd.f32 0.0, %v991
        %v993 = vpop.f32.mrb[0].mxu0
        %v994 = vpop.f32.mrb[0].mxu0
        %v995 = vadd.f32 0.0, %v994
        %v996 = vpop.f32.mrb[0].mxu0
        %997 = vdwg.mxu0
        %v999 = vsel %vm672, %v908, 0
        %1001 = vmatprep.subr.bf16.mxu0 0
        %1002 = vmatpush1.bf16.msra.mxu0 %v465
        %1003 = vmatprep.subr.bf16.mxu0 0
        %1004 = vmatpush1.bf16.msra.mxu0 0
        %1005 = vmatprep.subr.bf16.mxu0 0
        %1006 = vmatpush1.bf16.msra.mxu0 0
        %1007 = vmatprep.subr.bf16.mxu0 0
        %1008 = vmatpush1.bf16.msra.mxu0 0
        %1009 = vmatprep.subr.bf16.mxu0 0
        %1010 = vmatpush1.bf16.msra.mxu0 0
        %1011 = vmatprep.subr.bf16.mxu0 0
        %1012 = vmatpush1.bf16.msra.mxu0 0
        %1013 = vmatprep.subr.bf16.mxu0 0
        %1014 = vmatpush1.bf16.msra.mxu0 0
        %1015 = vmatprep.subr.bf16.mxu0 0
        %1016 = vmatpush1.bf16.msra.mxu0 0
        %1017 = vmatprep.subr.bf16.mxu0 0
        %1018 = vmatpush1.bf16.msra.mxu0 0
        %1019 = vmatprep.subr.bf16.mxu0 0
        %1020 = vmatpush1.bf16.msra.mxu0 0
        %1021 = vmatprep.subr.bf16.mxu0 0
        %1022 = vmatpush1.bf16.msra.mxu0 0
        %1023 = vmatprep.subr.bf16.mxu0 0
        %1024 = vmatpush1.bf16.msra.mxu0 0
        %1025 = vmatprep.subr.bf16.mxu0 0
        %1026 = vmatpush1.bf16.msra.mxu0 0
        %1027 = vmatprep.subr.bf16.mxu0 0
        %1028 = vmatpush1.bf16.msra.mxu0 0
        %1029 = vmatprep.subr.bf16.mxu0 0
        %1030 = vmatpush1.bf16.msra.mxu0 0
        %1031 = vmatprep.subr.bf16.mxu0 0
        %1032 = vmatpush1.bf16.msra.mxu0 0
        %1033 = vmatprep.mubr.bf16.mxu0 0
        %1034 = vmatmul.mubr.bf16.gmra.mrb[0].mxu0 %v999
        %v1035 = vpop.f32.mrb[0].mxu0
        %v1036 = vadd.f32 0.0, %v1035
        %v1037 = vpop.f32.mrb[0].mxu0
        %v1038 = vpop.f32.mrb[0].mxu0
        %v1039 = vadd.f32 0.0, %v1038
        %v1040 = vpop.f32.mrb[0].mxu0
        %1041 = vdwg.mxu0
        %v1043 = vsel %vm672, %v909, 0
        %1045 = vmatprep.subr.bf16.mxu0 0
        %1046 = vmatpush1.bf16.msra.mxu0 %v466
        %1047 = vmatprep.subr.bf16.mxu0 0
        %1048 = vmatpush1.bf16.msra.mxu0 0
        %1049 = vmatprep.subr.bf16.mxu0 0
        %1050 = vmatpush1.bf16.msra.mxu0 0
        %1051 = vmatprep.subr.bf16.mxu0 0
        %1052 = vmatpush1.bf16.msra.mxu0 0
        %1053 = vmatprep.subr.bf16.mxu0 0
        %1054 = vmatpush1.bf16.msra.mxu0 0
        %1055 = vmatprep.subr.bf16.mxu0 0
        %1056 = vmatpush1.bf16.msra.mxu0 0
        %1057 = vmatprep.subr.bf16.mxu0 0
        %1058 = vmatpush1.bf16.msra.mxu0 0
        %1059 = vmatprep.subr.bf16.mxu0 0
        %1060 = vmatpush1.bf16.msra.mxu0 0
        %1061 = vmatprep.subr.bf16.mxu0 0
        %1062 = vmatpush1.bf16.msra.mxu0 0
        %1063 = vmatprep.subr.bf16.mxu0 0
        %1064 = vmatpush1.bf16.msra.mxu0 0
        %1065 = vmatprep.subr.bf16.mxu0 0
        %1066 = vmatpush1.bf16.msra.mxu0 0
        %1067 = vmatprep.subr.bf16.mxu0 0
        %1068 = vmatpush1.bf16.msra.mxu0 0
        %1069 = vmatprep.subr.bf16.mxu0 0
        %1070 = vmatpush1.bf16.msra.mxu0 0
        %1071 = vmatprep.subr.bf16.mxu0 0
        %1072 = vmatpush1.bf16.msra.mxu0 0
        %1073 = vmatprep.subr.bf16.mxu0 0
        %1074 = vmatpush1.bf16.msra.mxu0 0
        %1075 = vmatprep.subr.bf16.mxu0 0
        %1076 = vmatpush1.bf16.msra.mxu0 0
        %1077 = vmatprep.mubr.bf16.mxu0 0
        %1078 = vmatmul.mubr.bf16.gmra.mrb[0].mxu0 %v1043
        %v1079 = vpop.f32.mrb[0].mxu0
        %v1080 = vadd.f32 0.0, %v1079
        %v1081 = vpop.f32.mrb[0].mxu0
        %v1082 = vpop.f32.mrb[0].mxu0
        %v1083 = vadd.f32 0.0, %v1082
        %v1084 = vpop.f32.mrb[0].mxu0
        %1085 = vdwg.mxu0
        %v1086 = vadd.f32 %v898, %v948
        %v1087 = vadd.f32 %v899, %v951
        %v1088 = vadd.f32 %v900, %v992
        %v1089 = vadd.f32 %v901, %v995
        %v1090 = vadd.f32 %v902, %v1036
        %v1091 = vadd.f32 %v903, %v1039
        %v1092 = vadd.f32 %v904, %v1080
        %v1093 = vadd.f32 %v905, %v1083
        %1094 = vst.msk [vmem:[#allocation4] sm:$0xff] %vm475, %v1086
        %1095 = vst.msk [vmem:[#allocation4 + $0x8] sm:$0xff] %vm475, %v1087
        %1096 = vst.msk [vmem:[#allocation4 + $0x10] sm:$0xff] %vm475, %v1088
        %1097 = vst.msk [vmem:[#allocation4 + $0x18] sm:$0xff] %vm475, %v1089
        %1098 = vst.msk [vmem:[#allocation4 + $0x20] sm:$0xff] %vm475, %v1090
        %1099 = vst.msk [vmem:[#allocation4 + $0x28] sm:$0xff] %vm475, %v1091
        %1100 = vst.msk [vmem:[#allocation4 + $0x30] sm:$0xff] %vm475, %v1092
        %1101 = vst.msk [vmem:[#allocation4 + $0x38] sm:$0xff] %vm475, %v1093
        %1102 = vst.msk [vmem:[#allocation2] sm:$0xff] %vm841, %v697
        %1103 = vst.msk [vmem:[#allocation2 + $0x8] sm:$0xff] %vm841, %v698
        %1104 = vst.msk [vmem:[#allocation2 + $0x10] sm:$0xff] %vm841, %v699
        %1105 = vst.msk [vmem:[#allocation2 + $0x18] sm:$0xff] %vm841, %v700
        %1106 = vst.msk [vmem:[#allocation2 + $0x20] sm:$0xff] %vm841, %v701
        %1107 = vst.msk [vmem:[#allocation2 + $0x28] sm:$0xff] %vm841, %v702
        %1108 = vst.msk [vmem:[#allocation2 + $0x30] sm:$0xff] %vm841, %v703
        %1109 = vst.msk [vmem:[#allocation2 + $0x38] sm:$0xff] %vm841, %v704
        // Predicated region
        $region57: #{tpu_custom_call.1} parent=35 // pred_check
          %p1110 = pneg %p393
        $region58: #{tpu_custom_call.1} parent=35 // pred_check_branch
          %1112 = sbr.rel (%p1110) target = $region60
        $region59: #{tpu_custom_call.1} parent=35 // pred_region
          %v1113 = vld [vmem:[#allocation3] sm:$0xff]
          %v1114 = vld [vmem:[#allocation3 + $0x8] sm:$0xff]
          %v1115 = vld [vmem:[#allocation3 + $0x10] sm:$0xff]
          %v1116 = vld [vmem:[#allocation3 + $0x18] sm:$0xff]
          %v1117 = vld [vmem:[#allocation3 + $0x20] sm:$0xff]
          %v1118 = vld [vmem:[#allocation3 + $0x28] sm:$0xff]
          %v1119 = vld [vmem:[#allocation3 + $0x30] sm:$0xff]
          %v1120 = vld [vmem:[#allocation3 + $0x38] sm:$0xff]
          %v1121 = vrcp.pop %v1113
          %v1122 = vrcp.pop %v1114
          %v1123 = vrcp.pop %v1115
          %v1124 = vrcp.pop %v1116
          %v1125 = vrcp.pop %v1117
          %v1126 = vrcp.pop %v1118
          %v1127 = vrcp.pop %v1119
          %v1128 = vrcp.pop %v1120
          %v1129 = vld [vmem:[#allocation4] sm:$0xff]
          %v1130 = vld [vmem:[#allocation4 + $0x8] sm:$0xff]
          %v1131 = vld [vmem:[#allocation4 + $0x10] sm:$0xff]
          %v1132 = vld [vmem:[#allocation4 + $0x18] sm:$0xff]
          %v1133 = vld [vmem:[#allocation4 + $0x20] sm:$0xff]
          %v1134 = vld [vmem:[#allocation4 + $0x28] sm:$0xff]
          %v1135 = vld [vmem:[#allocation4 + $0x30] sm:$0xff]
          %v1136 = vld [vmem:[#allocation4 + $0x38] sm:$0xff]
          %1138 = vset.pattern.permute.xlu0 0
          %1139 = vperm.xlu0 %1138, %v1121
          %v1140 = vpop.permute.xlu0 %1139
          %1143 = vset.pattern.permute.xlu0 0
          %1144 = vperm.xlu0 %1143, %v1122
          %v1145 = vpop.permute.xlu0 %1144
          %1148 = vset.pattern.permute.xlu0 0
          %1149 = vperm.xlu0 %1148, %v1123
          %v1150 = vpop.permute.xlu0 %1149
          %1153 = vset.pattern.permute.xlu0 0
          %1154 = vperm.xlu0 %1153, %v1124
          %v1155 = vpop.permute.xlu0 %1154
          %1158 = vset.pattern.permute.xlu0 0
          %1159 = vperm.xlu0 %1158, %v1125
          %v1160 = vpop.permute.xlu0 %1159
          %1163 = vset.pattern.permute.xlu0 0
          %1164 = vperm.xlu0 %1163, %v1126
          %v1165 = vpop.permute.xlu0 %1164
          %1168 = vset.pattern.permute.xlu0 0
          %1169 = vperm.xlu0 %1168, %v1127
          %v1170 = vpop.permute.xlu0 %1169
          %1173 = vset.pattern.permute.xlu0 0
          %1174 = vperm.xlu0 %1173, %v1128
          %v1175 = vpop.permute.xlu0 %1174
          %v1177 = vmul.f32 %v1129, %v1140
          %v1178 = vmul.f32 %v1130, %v1145
          %v1179 = vmul.f32 %v1131, %v1150
          %v1180 = vmul.f32 %v1132, %v1155
          %v1181 = vmul.f32 %v1133, %v1160
          %v1182 = vmul.f32 %v1134, %v1165
          %v1183 = vmul.f32 %v1135, %v1170
          %v1184 = vmul.f32 %v1136, %v1175
          %1185 = vst.msk [vmem:[%s384] sm:$0xff] %vm475, %v1177
          %1186 = vst.msk [vmem:[%s384 + $0x8] sm:$0xff] %vm475, %v1178
          %1187 = vst.msk [vmem:[%s384 + $0x10] sm:$0xff] %vm475, %v1179
          %1188 = vst.msk [vmem:[%s384 + $0x18] sm:$0xff] %vm475, %v1180
          %1189 = vst.msk [vmem:[%s384 + $0x20] sm:$0xff] %vm475, %v1181
          %1190 = vst.msk [vmem:[%s384 + $0x28] sm:$0xff] %vm475, %v1182
          %1191 = vst.msk [vmem:[%s384 + $0x30] sm:$0xff] %vm475, %v1183
          %1192 = vst.msk [vmem:[%s384 + $0x38] sm:$0xff] %vm475, %v1184
        $region60: #{tpu_custom_call.1} parent=35 // pred_fallthru
          _
        %s1193 = sand.u32 %s174, 1
        %s1194 = scalar_lea.sflag [#allocation7], %s1193
        %s1195 = sand.u32 %s174, 1
        %s1196 = smul.addr %s1195, 64
        %s1197 = scalar_lea.vmem [#allocation13], %s1196
        // Predicated region
        $region61: #{tpu_custom_call.1} parent=35 // pred_check
          %p1198 = pneg %p184
        $region62: #{tpu_custom_call.1} parent=35 // pred_check_branch
          %1200 = sbr.rel (%p1198) target = $region64
        $region63: #{tpu_custom_call.1} parent=35 // pred_region
          %s1201 = smul.u32 4, %s33
          %s1203 = ssub.s32 1024, 1024
          %1204 = vsyncadd %s1194, %s1203
          %s1205 = smul.addr %s1201, 2
          %s1206 = smul.addr %s32, 8
          %s1207 = sadd.s32 %s1205, %s1206
          %s1208 = smul.addr %s1207, 128
          %s1209 = scalar_lea.hbm %s4, %s1208
          %s1210 = sshll.u32 %s1197, 4
          %s1211 = int_to_ptr.vmem [resolvable:$true] %s1210
          %1216 = dma.vmem_to_hbm [thread:$0]  %s1211, 1024, %s1209, %s1194, 128, 128, 8
        $region64: #{tpu_custom_call.1} parent=35 // pred_fallthru
          _
      $region36: #{tpu_custom_call.1} parent=5 // pred_fallthru
        _
      %p1217 = scmp.le.s32.totalorder 2, %s22
      // Predicated region
      $region65: #{tpu_custom_call.1} parent=5 // pred_check
        %p1218 = pneg %p1217
      $region66: #{tpu_custom_call.1} parent=5 // pred_check_branch
        %1220 = sbr.rel (%p1218) target = $region68
      $region67: #{tpu_custom_call.1} parent=5 // pred_region
        %s1221 = ssub.s32 %s22, 2
        // Predicated region
        $region69: #{tpu_custom_call.1} parent=67 // pred_check
          %p1222 = pneg %p190
        $region70: #{tpu_custom_call.1} parent=67 // pred_check_branch
          %1224 = sbr.rel (%p1222) target = $region72
        $region71: #{tpu_custom_call.1} parent=67 // pred_region
          %s1225 = sand.u32 %s175, 1
          %s1226 = scalar_lea.sflag [#allocation7], %s1225
          %s1227 = sand.u32 %s175, 1
          %s1228 = smul.addr %s1227, 64
          %s1229 = scalar_lea.vmem [#allocation13], %s1228
          %1230 = dma.done %s1226, 1024
        $region72: #{tpu_custom_call.1} parent=67 // pred_fallthru
          _
      $region68: #{tpu_custom_call.1} parent=5 // pred_fallthru
        _
    $region6: #{tpu_custom_call.1} parent=1 // loop_footer
      %s26 = sadd.s32 1, %s22
    $region7: #{tpu_custom_call.1} parent=1 // loop_footer_branch
      %21 = sbr.rel target = $region3
    $region8: #{tpu_custom_call.1} parent=1 // loop_exit
      _
    %1231 = vsyncpa [#allocation6], 1
    %s1232 = scalar_lea.sflag [#allocation6], 1
    %1233 = vsyncpa %s1232, 1
    %1234 = vsyncpa [#allocation9], 1
    %s1235 = scalar_lea.sflag [#allocation9], 1
    %1236 = vsyncpa %s1235, 1
    %1237 = vsyncpa [#allocation12], 1
    %s1238 = scalar_lea.sflag [#allocation12], 1
    %1239 = vsyncpa %s1238, 1
    %1240 = vsyncpa [#allocation7], 1
    %s1241 = scalar_lea.sflag [#allocation7], 1
    %1242 = vsyncpa %s1241, 1

</llo_original>
